<compile_context>
chip_gen: v7x
topology: tpu7x:2x2x1
jax: 0.10.0
libtpu: 0.0.40
codegen_flags: <defaults>
</compile_context>

<pallas_src>
import jax
import jax.numpy as jnp
from jax.experimental import pallas as pl
from jax.experimental.pallas import tpu as pltpu

# ---- synthetic config (CONFIG file is not available; pick small consistent dims) ----
INC_R = 19
NUM_CLS = 13
F_IN = INC_R + NUM_CLS      # self.f = 32
K_OUT = 3                   # self.k = OUT_T (only [:, 0:3] is ever used)
K_PAD = 128                 # lane-dense padded output width
BN_EPS = 1e-5
LAYER_DIMS = [(F_IN, 1024), (1024, 256), (256, 256), (256, K_OUT)]


def posenet_kernel(x_ref,
                   w1_ref, c1_ref,
                   w2_ref, c2_ref,
                   w3_ref, c3_ref,
                   w4_ref, b4_ref,
                   out_ref):
    """Whole TBase MLP for one row tile:
       conv1/bn1/relu -> conv2/bn2/relu -> conv3/bn3/relu -> conv4(+pad).

    Eval-mode BatchNorm + conv bias are pre-folded:
        bn(conv(x)) = x @ (W * diag(scale)) + shift
    so each layer is just matmul (bf16 in, f32 acc) + add + relu.
    """
    x = x_ref[...]                                                   # (TM, F_IN) bf16

    h = jnp.dot(x, w1_ref[...], preferred_element_type=jnp.float32)  # (TM, 1024) f32
    h = jnp.maximum(h + c1_ref[...], 0.0)

    h = jnp.dot(h.astype(jnp.bfloat16), w2_ref[...],
                preferred_element_type=jnp.float32)                  # (TM, 256)
    h = jnp.maximum(h + c2_ref[...], 0.0)

    h = jnp.dot(h.astype(jnp.bfloat16), w3_ref[...],
                preferred_element_type=jnp.float32)                  # (TM, 256)
    h = jnp.maximum(h + c3_ref[...], 0.0)

    # drop1 = nn.Dropout(0.2): identity at inference.
    # TODO(synk): training-mode dropout (stateful PRNG mask) not implemented.

    out = jnp.dot(h.astype(jnp.bfloat16), w4_ref[...],
                  preferred_element_type=jnp.float32) + b4_ref[...]  # (TM, 128)
    out_ref[...] = out


def init_params(key):
    """Deterministic synthetic weights with the shapes implied by TBase.__init__."""
    keys = jax.random.split(key, 24)
    ki = iter(keys)
    params = {}
    for li, (cin, cout) in enumerate(LAYER_DIMS, start=1):
        scale = 1.0 / jnp.sqrt(jnp.float32(cin))
        # Conv1d weight is (cout, cin, 1) in torch; stored pre-transposed (cin, cout).
        params[f"w{li}"] = jax.random.normal(next(ki), (cin, cout), jnp.float32) * scale
        params[f"b{li}"] = jax.random.normal(next(ki), (cout,), jnp.float32) * scale
    for li, c in zip((1, 2, 3), (1024, 256, 256)):
        params[f"gamma{li}"] = 1.0 + 0.1 * jax.random.normal(next(ki), (c,), jnp.float32)
        params[f"beta{li}"] = 0.1 * jax.random.normal(next(ki), (c,), jnp.float32)
        params[f"mean{li}"] = 0.1 * jax.random.normal(next(ki), (c,), jnp.float32)
        params[f"var{li}"] = 0.5 + jnp.abs(jax.random.normal(next(ki), (c,), jnp.float32))
    return params


def prepare_params(params):
    """Fold eval-mode BN (+conv bias) into bf16 weights and f32 per-channel shifts,
    and pad the final layer to K_PAD lanes."""
    prepped = {}
    for li in (1, 2, 3):
        gamma, beta = params[f"gamma{li}"], params[f"beta{li}"]
        mean, var = params[f"mean{li}"], params[f"var{li}"]
        bias = params[f"b{li}"]
        scale = gamma / jnp.sqrt(var + BN_EPS)
        shift = (bias - mean) * scale + beta
        # (x @ W) * scale == x @ (W * diag(scale))  -> fold scale into W, keep shift.
        prepped[f"w{li}"] = (params[f"w{li}"] * scale[None, :]).astype(jnp.bfloat16)
        prepped[f"c{li}"] = shift[None, :].astype(jnp.float32)
    w4 = jnp.zeros((256, K_PAD), jnp.float32).at[:, :K_OUT].set(params["w4"])
    b4 = jnp.zeros((1, K_PAD), jnp.float32).at[0, :K_OUT].set(params["b4"])
    prepped["w4"] = w4.astype(jnp.bfloat16)
    prepped["b4"] = b4
    return prepped


def posenet_forward(feat, params):
    """PoseNet.forward(feat) -> (None, None, t) with t = TBase(feat)[:, 0:3]."""
    B, C, L = feat.shape
    assert C == F_IN and L == 1, "TBase expects (B, INC_R+NUM_CLS, 1) for squeeze(2)"
    M = B * L

    # NCL -> (B*L, C): channels on the lane (fast) axis.  bf16 MXU operand.
    x = jnp.transpose(feat, (0, 2, 1)).reshape(M, C).astype(jnp.bfloat16)

    p = prepare_params(params)

    # Row tile: 256 feeds the 256x256 MXUs on v6e/v7x; 128 minimum keeps layouts
    # comfortable for tiny batches.  Pad rows to a whole number of tiles.
    TM = 256 if M > 128 else 128
    num_tiles = pl.cdiv(M, TM)
    M_pad = num_tiles * TM
    x_p = jnp.zeros((M_pad, F_IN), jnp.bfloat16).at[:M].set(x)

    weight_bytes = 2 * (F_IN * 1024 + 1024 * 256 + 256 * 256 + 256 * K_PAD)
    shift_bytes = 4 * (1024 + 256 + 256 + K_PAD)
    flops = 2 * M_pad * (F_IN * 1024 + 1024 * 256 + 256 * 256 + 256 * K_PAD)
    bytes_accessed = weight_bytes + shift_bytes + 2 * M_pad * F_IN + 4 * M_pad * K_PAD
    cost = pl.CostEstimate(flops=flops, transcendentals=0,
                           bytes_accessed=bytes_accessed)

    grid_spec = pltpu.PrefetchScalarGridSpec(
        num_scalar_prefetch=0,
        grid=(num_tiles,),
        in_specs=[
            pl.BlockSpec((TM, F_IN), lambda i: (i, 0)),        # x tile
            pl.BlockSpec((F_IN, 1024), lambda i: (0, 0)),      # w1 (resident)
            pl.BlockSpec((1, 1024), lambda i: (0, 0)),         # shift1
            pl.BlockSpec((1024, 256), lambda i: (0, 0)),       # w2
            pl.BlockSpec((1, 256), lambda i: (0, 0)),          # shift2
            pl.BlockSpec((256, 256), lambda i: (0, 0)),        # w3
            pl.BlockSpec((1, 256), lambda i: (0, 0)),          # shift3
            pl.BlockSpec((256, K_PAD), lambda i: (0, 0)),      # w4 (padded)
            pl.BlockSpec((1, K_PAD), lambda i: (0, 0)),        # b4 (padded)
        ],
        out_specs=pl.BlockSpec((TM, K_PAD), lambda i: (i, 0)),
    )

    out = pl.pallas_call(
        posenet_kernel,
        out_shape=jax.ShapeDtypeStruct((M_pad, K_PAD), jnp.float32),
        grid_spec=grid_spec,
        compiler_params=pltpu.CompilerParams(
            dimension_semantics=("parallel",)),     # shards across TCs on v7x
        cost_estimate=cost,
    )(x_p,
      p["w1"], p["c1"], p["w2"], p["c2"], p["w3"], p["c3"], p["w4"], p["b4"])

    t = out[:M, :K_OUT]          # x[:, 0:3] after squeeze(2)
    rc1, rc2 = None, None
    return rc1, rc2, t


def reference_forward(feat, params):
    """Pure-JAX reference mirroring the kernel's math (bf16 operands, f32 accumulate)."""
    p = prepare_params(params)
    x = jnp.transpose(feat, (0, 2, 1)).reshape(-1, F_IN).astype(jnp.bfloat16)
    h = x
    for li in (1, 2, 3):
        h = jnp.dot(h, p[f"w{li}"], preferred_element_type=jnp.float32)
        h = jnp.maximum(h + p[f"c{li}"], 0.0).astype(jnp.bfloat16)
    out = jnp.dot(h, p["w4"], preferred_element_type=jnp.float32) + p["b4"]
    return out[:, :K_OUT]


if __name__ == "__main__":
    key = jax.random.PRNGKey(0)
    kp, kx = jax.random.split(key)
    params = init_params(kp)

    B = 2
    feat = jax.random.normal(kx, (B, F_IN, 1), jnp.float32)   # NCL, L=1

    rc1, rc2, t = posenet_forward(feat, params)
    t = jax.block_until_ready(t)

    t_ref = reference_forward(feat, params)
    assert t.shape == (B, 3)
    assert jnp.allclose(t, t_ref, atol=1e-3, rtol=1e-3), \
        f"max abs err {jnp.max(jnp.abs(t - t_ref))}"
    assert rc1 is None and rc2 is None

    print("KERNEL_OK")
</pallas_src>

<mosaic_0001>
module attributes {stable_mosaic.version = 11 : i64} {
  func.func @posenet_kernel(%arg0: i32, %arg1: memref<128x32xbf16, #tpu.memory_space<vmem>>, %arg2: memref<32x1024xbf16, #tpu.memory_space<vmem>>, %arg3: memref<1x1024xf32, #tpu.memory_space<vmem>>, %arg4: memref<1024x256xbf16, #tpu.memory_space<vmem>>, %arg5: memref<1x256xf32, #tpu.memory_space<vmem>>, %arg6: memref<256x256xbf16, #tpu.memory_space<vmem>>, %arg7: memref<1x256xf32, #tpu.memory_space<vmem>>, %arg8: memref<256x128xbf16, #tpu.memory_space<vmem>>, %arg9: memref<1x128xf32, #tpu.memory_space<vmem>>, %arg10: memref<128x128xf32, #tpu.memory_space<vmem>>) attributes {dimension_semantics = [#tpu.dimension_semantics<parallel>], iteration_bounds = array<i64: 1>, scalar_prefetch = 0 : i64, scratch_operands = 0 : i64, tpu.core_type = #tpu.core_type<tc>, window_params = [{transform_indices = @transform_0, window_bounds = array<i64: 128, 32>}, {pipeline_mode = #tpu.pipeline_mode<synchronous>, transform_indices = @transform_1, window_bounds = array<i64: 32, 1024>}, {pipeline_mode = #tpu.pipeline_mode<synchronous>, transform_indices = @transform_2, window_bounds = array<i64: 1, 1024>}, {pipeline_mode = #tpu.pipeline_mode<synchronous>, transform_indices = @transform_3, window_bounds = array<i64: 1024, 256>}, {pipeline_mode = #tpu.pipeline_mode<synchronous>, transform_indices = @transform_4, window_bounds = array<i64: 1, 256>}, {pipeline_mode = #tpu.pipeline_mode<synchronous>, transform_indices = @transform_5, window_bounds = array<i64: 256, 256>}, {pipeline_mode = #tpu.pipeline_mode<synchronous>, transform_indices = @transform_6, window_bounds = array<i64: 1, 256>}, {pipeline_mode = #tpu.pipeline_mode<synchronous>, transform_indices = @transform_7, window_bounds = array<i64: 256, 128>}, {pipeline_mode = #tpu.pipeline_mode<synchronous>, transform_indices = @transform_8, window_bounds = array<i64: 1, 128>}, {transform_indices = @transform_9, window_bounds = array<i64: 128, 128>}]} {
    %c0 = arith.constant 0 : index
    %c0_0 = arith.constant 0 : index
    %0 = vector.load %arg1[%c0, %c0_0] : memref<128x32xbf16, #tpu.memory_space<vmem>>, vector<128x32xbf16>
    %c0_1 = arith.constant 0 : index
    %c0_2 = arith.constant 0 : index
    %1 = vector.load %arg2[%c0_1, %c0_2] : memref<32x1024xbf16, #tpu.memory_space<vmem>>, vector<32x1024xbf16>
    %cst = arith.constant dense<0.000000e+00> : vector<128x1024xf32>
    %2 = tpu.matmul %0, %1, %cst {dimension_numbers = #tpu.dot_dimension_numbers<[1], [0], [0], [1], [0, 0, 1, 1], [], []>} : vector<128x32xbf16>, vector<32x1024xbf16>, vector<128x1024xf32> -> vector<128x1024xf32>
    %c0_3 = arith.constant 0 : index
    %c0_4 = arith.constant 0 : index
    %3 = vector.load %arg3[%c0_3, %c0_4] : memref<1x1024xf32, #tpu.memory_space<vmem>>, vector<1x1024xf32>
    %4 = vector.broadcast %3 : vector<1x1024xf32> to vector<128x1024xf32>
    %5 = arith.addf %2, %4 : vector<128x1024xf32>
    %cst_5 = arith.constant 0.000000e+00 : f32
    %6 = vector.broadcast %cst_5 : f32 to vector<128x1024xf32>
    %7 = arith.maximumf %5, %6 : vector<128x1024xf32>
    %8 = arith.truncf %7 : vector<128x1024xf32> to vector<128x1024xbf16>
    %c0_6 = arith.constant 0 : index
    %c0_7 = arith.constant 0 : index
    %9 = vector.load %arg4[%c0_6, %c0_7] : memref<1024x256xbf16, #tpu.memory_space<vmem>>, vector<1024x256xbf16>
    %cst_8 = arith.constant dense<0.000000e+00> : vector<128x256xf32>
    %10 = tpu.matmul %8, %9, %cst_8 {dimension_numbers = #tpu.dot_dimension_numbers<[1], [0], [0], [1], [0, 0, 1, 1], [], []>} : vector<128x1024xbf16>, vector<1024x256xbf16>, vector<128x256xf32> -> vector<128x256xf32>
    %c0_9 = arith.constant 0 : index
    %c0_10 = arith.constant 0 : index
    %11 = vector.load %arg5[%c0_9, %c0_10] : memref<1x256xf32, #tpu.memory_space<vmem>>, vector<1x256xf32>
    %12 = vector.broadcast %11 : vector<1x256xf32> to vector<128x256xf32>
    %13 = arith.addf %10, %12 : vector<128x256xf32>
    %cst_11 = arith.constant 0.000000e+00 : f32
    %14 = vector.broadcast %cst_11 : f32 to vector<128x256xf32>
    %15 = arith.maximumf %13, %14 : vector<128x256xf32>
    %16 = arith.truncf %15 : vector<128x256xf32> to vector<128x256xbf16>
    %c0_12 = arith.constant 0 : index
    %c0_13 = arith.constant 0 : index
    %17 = vector.load %arg6[%c0_12, %c0_13] : memref<256x256xbf16, #tpu.memory_space<vmem>>, vector<256x256xbf16>
    %cst_14 = arith.constant dense<0.000000e+00> : vector<128x256xf32>
    %18 = tpu.matmul %16, %17, %cst_14 {dimension_numbers = #tpu.dot_dimension_numbers<[1], [0], [0], [1], [0, 0, 1, 1], [], []>} : vector<128x256xbf16>, vector<256x256xbf16>, vector<128x256xf32> -> vector<128x256xf32>
    %c0_15 = arith.constant 0 : index
    %c0_16 = arith.constant 0 : index
    %19 = vector.load %arg7[%c0_15, %c0_16] : memref<1x256xf32, #tpu.memory_space<vmem>>, vector<1x256xf32>
    %20 = vector.broadcast %19 : vector<1x256xf32> to vector<128x256xf32>
    %21 = arith.addf %18, %20 : vector<128x256xf32>
    %cst_17 = arith.constant 0.000000e+00 : f32
    %22 = vector.broadcast %cst_17 : f32 to vector<128x256xf32>
    %23 = arith.maximumf %21, %22 : vector<128x256xf32>
    %24 = arith.truncf %23 : vector<128x256xf32> to vector<128x256xbf16>
    %c0_18 = arith.constant 0 : index
    %c0_19 = arith.constant 0 : index
    %25 = vector.load %arg8[%c0_18, %c0_19] : memref<256x128xbf16, #tpu.memory_space<vmem>>, vector<256x128xbf16>
    %cst_20 = arith.constant dense<0.000000e+00> : vector<128x128xf32>
    %26 = tpu.matmul %24, %25, %cst_20 {dimension_numbers = #tpu.dot_dimension_numbers<[1], [0], [0], [1], [0, 0, 1, 1], [], []>} : vector<128x256xbf16>, vector<256x128xbf16>, vector<128x128xf32> -> vector<128x128xf32>
    %c0_21 = arith.constant 0 : index
    %c0_22 = arith.constant 0 : index
    %27 = vector.load %arg9[%c0_21, %c0_22] : memref<1x128xf32, #tpu.memory_space<vmem>>, vector<1x128xf32>
    %28 = vector.broadcast %27 : vector<1x128xf32> to vector<128x128xf32>
    %29 = arith.addf %26, %28 : vector<128x128xf32>
    %c0_23 = arith.constant 0 : index
    %c0_24 = arith.constant 0 : index
    %30 = vector.load %arg10[%c0_23, %c0_24] : memref<128x128xf32, #tpu.memory_space<vmem>>, vector<128x128xf32>
    tpu.vector_store %arg10[%c0_23, %c0_24], %29 {strides = array<i32>} : memref<128x128xf32, #tpu.memory_space<vmem>>, vector<128x128xf32>,
    return
  }
  func.func @transform_0(%arg0: i32) -> (i32, i32) {
    %c0_i32 = arith.constant 0 : i32
    %c0_i32_0 = arith.constant 0 : i32
    return %arg0, %c0_i32 : i32, i32
  }
  func.func @transform_1(%arg0: i32) -> (i32, i32) {
    %c0_i32 = arith.constant 0 : i32
    %c0_i32_0 = arith.constant 0 : i32
    %c0_i32_1 = arith.constant 0 : i32
    return %c0_i32, %c0_i32_0 : i32, i32
  }
  func.func @transform_2(%arg0: i32) -> (i32, i32) {
    %c0_i32 = arith.constant 0 : i32
    %c0_i32_0 = arith.constant 0 : i32
    %c0_i32_1 = arith.constant 0 : i32
    return %c0_i32, %c0_i32_0 : i32, i32
  }
  func.func @transform_3(%arg0: i32) -> (i32, i32) {
    %c0_i32 = arith.constant 0 : i32
    %c0_i32_0 = arith.constant 0 : i32
    %c0_i32_1 = arith.constant 0 : i32
    return %c0_i32, %c0_i32_0 : i32, i32
  }
  func.func @transform_4(%arg0: i32) -> (i32, i32) {
    %c0_i32 = arith.constant 0 : i32
    %c0_i32_0 = arith.constant 0 : i32
    %c0_i32_1 = arith.constant 0 : i32
    return %c0_i32, %c0_i32_0 : i32, i32
  }
  func.func @transform_5(%arg0: i32) -> (i32, i32) {
    %c0_i32 = arith.constant 0 : i32
    %c0_i32_0 = arith.constant 0 : i32
    %c0_i32_1 = arith.constant 0 : i32
    return %c0_i32, %c0_i32_0 : i32, i32
  }
  func.func @transform_6(%arg0: i32) -> (i32, i32) {
    %c0_i32 = arith.constant 0 : i32
    %c0_i32_0 = arith.constant 0 : i32
    %c0_i32_1 = arith.constant 0 : i32
    return %c0_i32, %c0_i32_0 : i32, i32
  }
  func.func @transform_7(%arg0: i32) -> (i32, i32) {
    %c0_i32 = arith.constant 0 : i32
    %c0_i32_0 = arith.constant 0 : i32
    %c0_i32_1 = arith.constant 0 : i32
    return %c0_i32, %c0_i32_0 : i32, i32
  }
  func.func @transform_8(%arg0: i32) -> (i32, i32) {
    %c0_i32 = arith.constant 0 : i32
    %c0_i32_0 = arith.constant 0 : i32
    %c0_i32_1 = arith.constant 0 : i32
    return %c0_i32, %c0_i32_0 : i32, i32
  }
  func.func @transform_9(%arg0: i32) -> (i32, i32) {
    %c0_i32 = arith.constant 0 : i32
    %c0_i32_0 = arith.constant 0 : i32
    return %arg0, %c0_i32 : i32, i32
  }
}

</mosaic_0001>

<llo_original>
// kernel: tpu_custom_call.1
$region0: #{tpu_custom_call.1}
  #allocation0 [shape = 'u32[]', space=smem, size = 0x4, offset = 0x4, fixed_abs, tag = 'smem constant byte address 0x4 - core index']
  #allocation1 [shape = 'u32[144,128]{1,0:T(1,128)}', space=vmem, size = 0x12000, scoped, tag = 'internal scratch']
  %s0 = inlined_call_operand.vmem [shape: bf16[128,32], index: 0, kind: input, shape index: {}]
  %s1 = inlined_call_operand.hbm [shape: bf16[32,1024], index: 1, kind: input, shape index: {}]
  %s2 = inlined_call_operand.vmem [shape: f32[1,1024], index: 2, kind: input, shape index: {}]
  %s3 = inlined_call_operand.hbm [shape: bf16[1024,256], index: 3, kind: input, shape index: {}]
  %s4 = inlined_call_operand.vmem [shape: f32[1,256], index: 4, kind: input, shape index: {}]
  %s5 = inlined_call_operand.hbm [shape: bf16[256,256], index: 5, kind: input, shape index: {}]
  %s6 = inlined_call_operand.vmem [shape: f32[1,256], index: 6, kind: input, shape index: {}]
  %s7 = inlined_call_operand.hbm [shape: bf16[256,128], index: 7, kind: input, shape index: {}]
  %s8 = inlined_call_operand.vmem [shape: f32[1,128], index: 8, kind: input, shape index: {}]
  %s9 = inlined_call_operand.hbm [shape: f32[128,128], index: 9, kind: output, shape index: {}]
  %s10 = sld [smem:[#allocation0]]
  $region62: #{tpu_custom_call.1} parent=0
    _
  %s12 = ssub.s32 1, %s10
  %s13 = scalar_select 0, %s12, %s10
  $region1: #{tpu_custom_call.1} parent=0
    #allocation2 [shape = 'u8[65536]{0}', space=vmem, size = 0x10000, scoped, tag = 'input window, operand 1, single buffered']
    #allocation3 [shape = 's32[1]{0}', space=sflag, size = 0x4, scoped, tag = 'scoped memory for tpu_custom_call.1']
    #allocation4 [shape = 's32[1]{0}', space=sflag, size = 0x4, scoped, tag = 'scoped memory for tpu_custom_call.1']
    #allocation5 [shape = 'u8[524288]{0}', space=vmem, size = 0x80000, scoped, tag = 'input window, operand 3, single buffered']
    #allocation6 [shape = 's32[1]{0}', space=sflag, size = 0x4, scoped, tag = 'scoped memory for tpu_custom_call.1']
    #allocation7 [shape = 'u8[131072]{0}', space=vmem, size = 0x20000, scoped, tag = 'input window, operand 5, single buffered']
    #allocation8 [shape = 'u8[65536]{0}', space=vmem, size = 0x10000, scoped, tag = 'input window, operand 7, single buffered']
    #allocation9 [shape = 's32[1]{0}', space=sflag, size = 0x4, scoped, tag = 'scoped memory for tpu_custom_call.1']
    #allocation10 [shape = 'u8[65536]{0}', space=vmem, size = 0x10000, scoped, tag = 'output window, operand 0, single buffered']
    %14 = vsyncpa [#allocation3], 0
    %15 = vsyncpa [#allocation6], 0
    %16 = vsyncpa [#allocation9], 0
    %17 = vsyncpa [#allocation4], 0
    // Predicated region
    $region2: #{tpu_custom_call.1} parent=1 // pred_check
      _
    $region3: #{tpu_custom_call.1} parent=1 // pred_check_branch
      %19 = sbr.rel (0) target = $region5
    $region4: #{tpu_custom_call.1} parent=1 // pred_region
      _
    $region5: #{tpu_custom_call.1} parent=1 // pred_fallthru
      _
    // Predicated region
    $region6: #{tpu_custom_call.1} parent=1 // pred_check
      _
    $region7: #{tpu_custom_call.1} parent=1 // pred_check_branch
      %21 = sbr.rel (0) target = $region9
    $region8: #{tpu_custom_call.1} parent=1 // pred_region
      %s23 = ssub.s32 2048, 2048
      %24 = vsyncadd [#allocation3], %s23
      %s25 = sshll.u32 [#allocation2], 4
      %s26 = int_to_ptr.vmem [resolvable:$true] %s25
      %31 = dma.hbm_to_vmem [thread:$0]  %s1, 2048, %s26, [#allocation3], 512, 512, 32
    $region9: #{tpu_custom_call.1} parent=1 // pred_fallthru
      _
    // Predicated region
    $region10: #{tpu_custom_call.1} parent=1 // pred_check
      _
    $region11: #{tpu_custom_call.1} parent=1 // pred_check_branch
      %33 = sbr.rel (0) target = $region13
    $region12: #{tpu_custom_call.1} parent=1 // pred_region
      _
    $region13: #{tpu_custom_call.1} parent=1 // pred_fallthru
      _
    // Predicated region
    $region14: #{tpu_custom_call.1} parent=1 // pred_check
      _
    $region15: #{tpu_custom_call.1} parent=1 // pred_check_branch
      %35 = sbr.rel (0) target = $region17
    $region16: #{tpu_custom_call.1} parent=1 // pred_region
      %s37 = ssub.s32 16384, 16384
      %38 = vsyncadd [#allocation6], %s37
      %s39 = sshll.u32 [#allocation5], 4
      %s40 = int_to_ptr.vmem [resolvable:$true] %s39
      %45 = dma.hbm_to_vmem [thread:$0]  %s3, 16384, %s40, [#allocation6], 128, 128, 8
    $region17: #{tpu_custom_call.1} parent=1 // pred_fallthru
      _
    // Predicated region
    $region18: #{tpu_custom_call.1} parent=1 // pred_check
      _
    $region19: #{tpu_custom_call.1} parent=1 // pred_check_branch
      %47 = sbr.rel (0) target = $region21
    $region20: #{tpu_custom_call.1} parent=1 // pred_region
      _
    $region21: #{tpu_custom_call.1} parent=1 // pred_fallthru
      _
    // Predicated region
    $region22: #{tpu_custom_call.1} parent=1 // pred_check
      _
    $region23: #{tpu_custom_call.1} parent=1 // pred_check_branch
      %49 = sbr.rel (0) target = $region25
    $region24: #{tpu_custom_call.1} parent=1 // pred_region
      %s51 = ssub.s32 4096, 4096
      %52 = vsyncadd [#allocation6], %s51
      %s53 = sshll.u32 [#allocation7], 4
      %s54 = int_to_ptr.vmem [resolvable:$true] %s53
      %59 = dma.hbm_to_vmem [thread:$0]  %s5, 4096, %s54, [#allocation6], 128, 128, 8
    $region25: #{tpu_custom_call.1} parent=1 // pred_fallthru
      _
    // Predicated region
    $region26: #{tpu_custom_call.1} parent=1 // pred_check
      _
    $region27: #{tpu_custom_call.1} parent=1 // pred_check_branch
      %61 = sbr.rel (0) target = $region29
    $region28: #{tpu_custom_call.1} parent=1 // pred_region
      _
    $region29: #{tpu_custom_call.1} parent=1 // pred_fallthru
      _
    // Predicated region
    $region30: #{tpu_custom_call.1} parent=1 // pred_check
      _
    $region31: #{tpu_custom_call.1} parent=1 // pred_check_branch
      %63 = sbr.rel (0) target = $region33
    $region32: #{tpu_custom_call.1} parent=1 // pred_region
      %s65 = ssub.s32 2048, 2048
      %66 = vsyncadd [#allocation9], %s65
      %s67 = sshll.u32 [#allocation8], 4
      %s68 = int_to_ptr.vmem [resolvable:$true] %s67
      %73 = dma.hbm_to_vmem [thread:$0]  %s7, 2048, %s68, [#allocation9], 64, 64, 4
    $region33: #{tpu_custom_call.1} parent=1 // pred_fallthru
      _
    // Predicated region
    $region34: #{tpu_custom_call.1} parent=1 // pred_check
      _
    $region35: #{tpu_custom_call.1} parent=1 // pred_check_branch
      %75 = sbr.rel (0) target = $region37
    $region36: #{tpu_custom_call.1} parent=1 // pred_region
      _
    $region37: #{tpu_custom_call.1} parent=1 // pred_fallthru
      _
    // Predicated region
    $region38: #{tpu_custom_call.1} parent=1 // pred_check
      _
    $region39: #{tpu_custom_call.1} parent=1 // pred_check_branch
      %77 = sbr.rel (0) target = $region41
    $region40: #{tpu_custom_call.1} parent=1 // pred_region
      %78 = dma.done [#allocation3], 2048
    $region41: #{tpu_custom_call.1} parent=1 // pred_fallthru
      _
    // Predicated region
    $region42: #{tpu_custom_call.1} parent=1 // pred_check
      _
    $region43: #{tpu_custom_call.1} parent=1 // pred_check_branch
      %80 = sbr.rel (0) target = $region45
    $region44: #{tpu_custom_call.1} parent=1 // pred_region
      %81 = dma.done [#allocation6], 16384
    $region45: #{tpu_custom_call.1} parent=1 // pred_fallthru
      _
    // Predicated region
    $region46: #{tpu_custom_call.1} parent=1 // pred_check
      _
    $region47: #{tpu_custom_call.1} parent=1 // pred_check_branch
      %83 = sbr.rel (0) target = $region49
    $region48: #{tpu_custom_call.1} parent=1 // pred_region
      %84 = dma.done [#allocation6], 4096
    $region49: #{tpu_custom_call.1} parent=1 // pred_fallthru
      _
    // Predicated region
    $region50: #{tpu_custom_call.1} parent=1 // pred_check
      _
    $region51: #{tpu_custom_call.1} parent=1 // pred_check_branch
      %86 = sbr.rel (0) target = $region53
    $region52: #{tpu_custom_call.1} parent=1 // pred_region
      %87 = dma.done [#allocation9], 2048
    $region53: #{tpu_custom_call.1} parent=1 // pred_fallthru
      _
    %v89 = vld [vmem:[%s0] sm:$0xf]
    %v90 = vld [vmem:[%s0 + $0x4] sm:$0xf]
    %v91 = vld [vmem:[%s0 + $0x8] sm:$0xf]
    %v92 = vld [vmem:[%s0 + $0xc] sm:$0xf]
    %v93 = vld [vmem:[%s0 + $0x10] sm:$0xf]
    %v94 = vld [vmem:[%s0 + $0x14] sm:$0xf]
    %v95 = vld [vmem:[%s0 + $0x18] sm:$0xf]
    %v96 = vld [vmem:[%s0 + $0x1c] sm:$0xf]
    %v97 = vld [vmem:[%s0 + $0x20] sm:$0xf]
    %v98 = vld [vmem:[%s0 + $0x24] sm:$0xf]
    %v99 = vld [vmem:[%s0 + $0x28] sm:$0xf]
    %v100 = vld [vmem:[%s0 + $0x2c] sm:$0xf]
    %v101 = vld [vmem:[%s0 + $0x30] sm:$0xf]
    %v102 = vld [vmem:[%s0 + $0x34] sm:$0xf]
    %v103 = vld [vmem:[%s0 + $0x38] sm:$0xf]
    %v104 = vld [vmem:[%s0 + $0x3c] sm:$0xf]
    %v105 = vld [vmem:[#allocation2] sm:$0xff]
    %v106 = vld [vmem:[#allocation2 + $0x8] sm:$0xff]
    %v107 = vld [vmem:[#allocation2 + $0x10] sm:$0xff]
    %v108 = vld [vmem:[#allocation2 + $0x18] sm:$0xff]
    %v109 = vld [vmem:[#allocation2 + $0x20] sm:$0xff]
    %v110 = vld [vmem:[#allocation2 + $0x28] sm:$0xff]
    %v111 = vld [vmem:[#allocation2 + $0x30] sm:$0xff]
    %v112 = vld [vmem:[#allocation2 + $0x38] sm:$0xff]
    %v113 = vld [vmem:[#allocation2 + $0x40] sm:$0xff]
    %v114 = vld [vmem:[#allocation2 + $0x48] sm:$0xff]
    %v115 = vld [vmem:[#allocation2 + $0x50] sm:$0xff]
    %v116 = vld [vmem:[#allocation2 + $0x58] sm:$0xff]
    %v117 = vld [vmem:[#allocation2 + $0x60] sm:$0xff]
    %v118 = vld [vmem:[#allocation2 + $0x68] sm:$0xff]
    %v119 = vld [vmem:[#allocation2 + $0x70] sm:$0xff]
    %v120 = vld [vmem:[#allocation2 + $0x78] sm:$0xff]
    %v121 = vld [vmem:[%s2] sm:$0xff]
    %v123 = vlaneseq
    %v124 = vshrl.u32 %v123, 7
    %v125 = vsub.s32 0, %v124
    %v126 = vrot.slane %v121, %v125
    %v127 = vlaneseq
    %v128 = vshrl.u32 %v127, 7
    %v129 = vsub.s32 1, %v128
    %v130 = vrot.slane %v121, %v129
    %v131 = vlaneseq
    %v132 = vshrl.u32 %v131, 7
    %v133 = vsub.s32 2, %v132
    %v134 = vrot.slane %v121, %v133
    %v135 = vlaneseq
    %v136 = vshrl.u32 %v135, 7
    %v137 = vsub.s32 3, %v136
    %v138 = vrot.slane %v121, %v137
    %v139 = vlaneseq
    %v140 = vshrl.u32 %v139, 7
    %v141 = vsub.s32 4, %v140
    %v142 = vrot.slane %v121, %v141
    %v143 = vlaneseq
    %v144 = vshrl.u32 %v143, 7
    %v145 = vsub.s32 5, %v144
    %v146 = vrot.slane %v121, %v145
    %v147 = vlaneseq
    %v148 = vshrl.u32 %v147, 7
    %v149 = vsub.s32 6, %v148
    %v150 = vrot.slane %v121, %v149
    %v151 = vlaneseq
    %v152 = vshrl.u32 %v151, 7
    %v153 = vsub.s32 7, %v152
    %v154 = vrot.slane %v121, %v153
    %v179 = vunpack.c.l.b16 %v89
    %v180 = vunpack.c.l.b16 %v90
    %v181 = vunpack.c.l.b16 %v91
    %v182 = vunpack.c.l.b16 %v92
    %v183 = vunpack.c.l.b16 %v93
    %v184 = vunpack.c.l.b16 %v94
    %v185 = vunpack.c.l.b16 %v95
    %v186 = vunpack.c.l.b16 %v96
    %v187 = vunpack.c.l.b16 %v97
    %v188 = vunpack.c.l.b16 %v98
    %v189 = vunpack.c.l.b16 %v99
    %v190 = vunpack.c.l.b16 %v100
    %v191 = vunpack.c.l.b16 %v101
    %v192 = vunpack.c.l.b16 %v102
    %v193 = vunpack.c.l.b16 %v103
    %v194 = vunpack.c.l.b16 %v104
    %v195 = vpack.c.b16 %v180, %v179
    %v196 = vpack.c.b16 %v182, %v181
    %v197 = vpack.c.b16 %v184, %v183
    %v198 = vpack.c.b16 %v186, %v185
    %v199 = vpack.c.b16 %v188, %v187
    %v200 = vpack.c.b16 %v190, %v189
    %v201 = vpack.c.b16 %v192, %v191
    %v202 = vpack.c.b16 %v194, %v193
    %v219 = vunpack.c.l.b16 %v105
    %v220 = vunpack.c.h.b16 %v105
    %v221 = vunpack.c.l.b16 %v106
    %v222 = vunpack.c.h.b16 %v106
    %v223 = vunpack.c.l.b16 %v107
    %v224 = vunpack.c.h.b16 %v107
    %v225 = vunpack.c.l.b16 %v108
    %v226 = vunpack.c.h.b16 %v108
    %v227 = vunpack.c.l.b16 %v109
    %v228 = vunpack.c.h.b16 %v109
    %v229 = vunpack.c.l.b16 %v110
    %v230 = vunpack.c.h.b16 %v110
    %v231 = vunpack.c.l.b16 %v111
    %v232 = vunpack.c.h.b16 %v111
    %v233 = vunpack.c.l.b16 %v112
    %v234 = vunpack.c.h.b16 %v112
    %v235 = vunpack.c.l.b16 %v113
    %v236 = vunpack.c.h.b16 %v113
    %v237 = vunpack.c.l.b16 %v114
    %v238 = vunpack.c.h.b16 %v114
    %v239 = vunpack.c.l.b16 %v115
    %v240 = vunpack.c.h.b16 %v115
    %v241 = vunpack.c.l.b16 %v116
    %v242 = vunpack.c.h.b16 %v116
    %v243 = vunpack.c.l.b16 %v117
    %v244 = vunpack.c.h.b16 %v117
    %v245 = vunpack.c.l.b16 %v118
    %v246 = vunpack.c.h.b16 %v118
    %v247 = vunpack.c.l.b16 %v119
    %v248 = vunpack.c.h.b16 %v119
    %v249 = vunpack.c.l.b16 %v120
    %v250 = vunpack.c.h.b16 %v120
    %v251 = vpack.c.b16 %v227, %v219
    %v252 = vpack.c.b16 %v228, %v220
    %v253 = vpack.c.b16 %v229, %v221
    %v254 = vpack.c.b16 %v230, %v222
    %v255 = vpack.c.b16 %v231, %v223
    %v256 = vpack.c.b16 %v232, %v224
    %v257 = vpack.c.b16 %v233, %v225
    %v258 = vpack.c.b16 %v234, %v226
    %v259 = vpack.c.b16 %v243, %v235
    %v260 = vpack.c.b16 %v244, %v236
    %v261 = vpack.c.b16 %v245, %v237
    %v262 = vpack.c.b16 %v246, %v238
    %v263 = vpack.c.b16 %v247, %v239
    %v264 = vpack.c.b16 %v248, %v240
    %v265 = vpack.c.b16 %v249, %v241
    %v266 = vpack.c.b16 %v250, %v242
    %vm283 = vcmask 261120
    %v285 = vsel %vm283, %v195, 0
    %v288 = vsel %vm283, %v196, 0
    %v291 = vsel %vm283, %v197, 0
    %v294 = vsel %vm283, %v198, 0
    %v297 = vsel %vm283, %v199, 0
    %v300 = vsel %vm283, %v200, 0
    %v303 = vsel %vm283, %v201, 0
    %v306 = vsel %vm283, %v202, 0
    %308 = vmatprep.subr.bf16.mxu0 %v252
    %309 = vmatpush1.bf16.msra.mxu0 %v251
    %310 = vmatprep.subr.bf16.mxu0 %v260
    %311 = vmatpush1.bf16.msra.mxu0 %v259
    %312 = vmatprep.subr.bf16.mxu0 0
    %313 = vmatpush1.bf16.msra.mxu0 0
    %314 = vmatprep.subr.bf16.mxu0 0
    %315 = vmatpush1.bf16.msra.mxu0 0
    %316 = vmatprep.subr.bf16.mxu0 0
    %317 = vmatpush1.bf16.msra.mxu0 0
    %318 = vmatprep.subr.bf16.mxu0 0
    %319 = vmatpush1.bf16.msra.mxu0 0
    %320 = vmatprep.subr.bf16.mxu0 0
    %321 = vmatpush1.bf16.msra.mxu0 0
    %322 = vmatprep.subr.bf16.mxu0 0
    %323 = vmatpush1.bf16.msra.mxu0 0
    %324 = vmatprep.subr.bf16.mxu0 0
    %325 = vmatpush1.bf16.msra.mxu0 0
    %326 = vmatprep.subr.bf16.mxu0 0
    %327 = vmatpush1.bf16.msra.mxu0 0
    %328 = vmatprep.subr.bf16.mxu0 0
    %329 = vmatpush1.bf16.msra.mxu0 0
    %330 = vmatprep.subr.bf16.mxu0 0
    %331 = vmatpush1.bf16.msra.mxu0 0
    %332 = vmatprep.subr.bf16.mxu0 0
    %333 = vmatpush1.bf16.msra.mxu0 0
    %334 = vmatprep.subr.bf16.mxu0 0
    %335 = vmatpush1.bf16.msra.mxu0 0
    %336 = vmatprep.subr.bf16.mxu0 0
    %337 = vmatpush1.bf16.msra.mxu0 0
    %338 = vmatprep.subr.bf16.mxu0 0
    %339 = vmatpush1.bf16.msra.mxu0 0
    %340 = vmatprep.mubr.bf16.mxu0 0
    %341 = vmatmul.mubr.bf16.gmra.mrb[0].mxu0 %v285
    %v342 = vpop.f32.mrb[0].mxu0
    %v343 = vadd.f32 %v126, %v342
    %v344 = vpop.f32.mrb[0].mxu0
    %v345 = vadd.f32 %v130, %v344
    %v346 = vpop.f32.mrb[0].mxu0
    %v347 = vadd.f32 %v126, %v346
    %v348 = vpop.f32.mrb[0].mxu0
    %v349 = vadd.f32 %v130, %v348
    %350 = vmatprep.mubr.bf16.mxu0 0
    %351 = vmatmul.mubr.bf16.gmra.mrb[0].mxu0 %v288
    %v352 = vpop.f32.mrb[0].mxu0
    %v353 = vadd.f32 %v126, %v352
    %v354 = vpop.f32.mrb[0].mxu0
    %v355 = vadd.f32 %v130, %v354
    %v356 = vpop.f32.mrb[0].mxu0
    %v357 = vadd.f32 %v126, %v356
    %v358 = vpop.f32.mrb[0].mxu0
    %v359 = vadd.f32 %v130, %v358
    %360 = vmatprep.mubr.bf16.mxu0 0
    %361 = vmatmul.mubr.bf16.gmra.mrb[0].mxu0 %v291
    %v362 = vpop.f32.mrb[0].mxu0
    %v363 = vadd.f32 %v126, %v362
    %v364 = vpop.f32.mrb[0].mxu0
    %v365 = vadd.f32 %v130, %v364
    %v366 = vpop.f32.mrb[0].mxu0
    %v367 = vadd.f32 %v126, %v366
    %v368 = vpop.f32.mrb[0].mxu0
    %v369 = vadd.f32 %v130, %v368
    %370 = vmatprep.mubr.bf16.mxu0 0
    %371 = vmatmul.mubr.bf16.gmra.mrb[0].mxu0 %v294
    %v372 = vpop.f32.mrb[0].mxu0
    %v373 = vadd.f32 %v126, %v372
    %v374 = vpop.f32.mrb[0].mxu0
    %v375 = vadd.f32 %v130, %v374
    %v376 = vpop.f32.mrb[0].mxu0
    %v377 = vadd.f32 %v126, %v376
    %v378 = vpop.f32.mrb[0].mxu0
    %v379 = vadd.f32 %v130, %v378
    %380 = vmatprep.mubr.bf16.mxu0 0
    %381 = vmatmul.mubr.bf16.gmra.mrb[0].mxu0 %v297
    %v382 = vpop.f32.mrb[0].mxu0
    %v383 = vadd.f32 %v126, %v382
    %v384 = vpop.f32.mrb[0].mxu0
    %v385 = vadd.f32 %v130, %v384
    %v386 = vpop.f32.mrb[0].mxu0
    %v387 = vadd.f32 %v126, %v386
    %v388 = vpop.f32.mrb[0].mxu0
    %v389 = vadd.f32 %v130, %v388
    %390 = vmatprep.mubr.bf16.mxu0 0
    %391 = vmatmul.mubr.bf16.gmra.mrb[0].mxu0 %v300
    %v392 = vpop.f32.mrb[0].mxu0
    %v393 = vadd.f32 %v126, %v392
    %v394 = vpop.f32.mrb[0].mxu0
    %v395 = vadd.f32 %v130, %v394
    %v396 = vpop.f32.mrb[0].mxu0
    %v397 = vadd.f32 %v126, %v396
    %v398 = vpop.f32.mrb[0].mxu0
    %v399 = vadd.f32 %v130, %v398
    %400 = vmatprep.mubr.bf16.mxu0 0
    %401 = vmatmul.mubr.bf16.gmra.mrb[0].mxu0 %v303
    %v402 = vpop.f32.mrb[0].mxu0
    %v403 = vadd.f32 %v126, %v402
    %v404 = vpop.f32.mrb[0].mxu0
    %v405 = vadd.f32 %v130, %v404
    %v406 = vpop.f32.mrb[0].mxu0
    %v407 = vadd.f32 %v126, %v406
    %v408 = vpop.f32.mrb[0].mxu0
    %v409 = vadd.f32 %v130, %v408
    %410 = vmatprep.mubr.bf16.mxu0 0
    %411 = vmatmul.mubr.bf16.gmra.mrb[0].mxu0 %v306
    %v412 = vpop.f32.mrb[0].mxu0
    %v413 = vadd.f32 %v126, %v412
    %v414 = vpop.f32.mrb[0].mxu0
    %v415 = vadd.f32 %v130, %v414
    %v416 = vpop.f32.mrb[0].mxu0
    %v417 = vadd.f32 %v126, %v416
    %v418 = vpop.f32.mrb[0].mxu0
    %v419 = vadd.f32 %v130, %v418
    %420 = vdwg.mxu0
    %421 = vmatprep.subr.bf16.mxu0 %v254
    %422 = vmatpush1.bf16.msra.mxu0 %v253
    %423 = vmatprep.subr.bf16.mxu0 %v262
    %424 = vmatpush1.bf16.msra.mxu0 %v261
    %425 = vmatprep.subr.bf16.mxu0 0
    %426 = vmatpush1.bf16.msra.mxu0 0
    %427 = vmatprep.subr.bf16.mxu0 0
    %428 = vmatpush1.bf16.msra.mxu0 0
    %429 = vmatprep.subr.bf16.mxu0 0
    %430 = vmatpush1.bf16.msra.mxu0 0
    %431 = vmatprep.subr.bf16.mxu0 0
    %432 = vmatpush1.bf16.msra.mxu0 0
    %433 = vmatprep.subr.bf16.mxu0 0
    %434 = vmatpush1.bf16.msra.mxu0 0
    %435 = vmatprep.subr.bf16.mxu0 0
    %436 = vmatpush1.bf16.msra.mxu0 0
    %437 = vmatprep.subr.bf16.mxu0 0
    %438 = vmatpush1.bf16.msra.mxu0 0
    %439 = vmatprep.subr.bf16.mxu0 0
    %440 = vmatpush1.bf16.msra.mxu0 0
    %441 = vmatprep.subr.bf16.mxu0 0
    %442 = vmatpush1.bf16.msra.mxu0 0
    %443 = vmatprep.subr.bf16.mxu0 0
    %444 = vmatpush1.bf16.msra.mxu0 0
    %445 = vmatprep.subr.bf16.mxu0 0
    %446 = vmatpush1.bf16.msra.mxu0 0
    %447 = vmatprep.subr.bf16.mxu0 0
    %448 = vmatpush1.bf16.msra.mxu0 0
    %449 = vmatprep.subr.bf16.mxu0 0
    %450 = vmatpush1.bf16.msra.mxu0 0
    %451 = vmatprep.subr.bf16.mxu0 0
    %452 = vmatpush1.bf16.msra.mxu0 0
    %453 = vmatprep.mubr.bf16.mxu0 0
    %454 = vmatmul.mubr.bf16.gmra.mrb[0].mxu0 %v285
    %v455 = vpop.f32.mrb[0].mxu0
    %v456 = vadd.f32 %v134, %v455
    %v457 = vpop.f32.mrb[0].mxu0
    %v458 = vadd.f32 %v138, %v457
    %v459 = vpop.f32.mrb[0].mxu0
    %v460 = vadd.f32 %v134, %v459
    %v461 = vpop.f32.mrb[0].mxu0
    %v462 = vadd.f32 %v138, %v461
    %463 = vmatprep.mubr.bf16.mxu0 0
    %464 = vmatmul.mubr.bf16.gmra.mrb[0].mxu0 %v288
    %v465 = vpop.f32.mrb[0].mxu0
    %v466 = vadd.f32 %v134, %v465
    %v467 = vpop.f32.mrb[0].mxu0
    %v468 = vadd.f32 %v138, %v467
    %v469 = vpop.f32.mrb[0].mxu0
    %v470 = vadd.f32 %v134, %v469
    %v471 = vpop.f32.mrb[0].mxu0
    %v472 = vadd.f32 %v138, %v471
    %473 = vmatprep.mubr.bf16.mxu0 0
    %474 = vmatmul.mubr.bf16.gmra.mrb[0].mxu0 %v291
    %v475 = vpop.f32.mrb[0].mxu0
    %v476 = vadd.f32 %v134, %v475
    %v477 = vpop.f32.mrb[0].mxu0
    %v478 = vadd.f32 %v138, %v477
    %v479 = vpop.f32.mrb[0].mxu0
    %v480 = vadd.f32 %v134, %v479
    %v481 = vpop.f32.mrb[0].mxu0
    %v482 = vadd.f32 %v138, %v481
    %483 = vmatprep.mubr.bf16.mxu0 0
    %484 = vmatmul.mubr.bf16.gmra.mrb[0].mxu0 %v294
    %v485 = vpop.f32.mrb[0].mxu0
    %v486 = vadd.f32 %v134, %v485
    %v487 = vpop.f32.mrb[0].mxu0
    %v488 = vadd.f32 %v138, %v487
    %v489 = vpop.f32.mrb[0].mxu0
    %v490 = vadd.f32 %v134, %v489
    %v491 = vpop.f32.mrb[0].mxu0
    %v492 = vadd.f32 %v138, %v491
    %493 = vmatprep.mubr.bf16.mxu0 0
    %494 = vmatmul.mubr.bf16.gmra.mrb[0].mxu0 %v297
    %v495 = vpop.f32.mrb[0].mxu0
    %v496 = vadd.f32 %v134, %v495
    %v497 = vpop.f32.mrb[0].mxu0
    %v498 = vadd.f32 %v138, %v497
    %v499 = vpop.f32.mrb[0].mxu0
    %v500 = vadd.f32 %v134, %v499
    %v501 = vpop.f32.mrb[0].mxu0
    %v502 = vadd.f32 %v138, %v501
    %503 = vmatprep.mubr.bf16.mxu0 0
    %504 = vmatmul.mubr.bf16.gmra.mrb[0].mxu0 %v300
    %v505 = vpop.f32.mrb[0].mxu0
    %v506 = vadd.f32 %v134, %v505
    %v507 = vpop.f32.mrb[0].mxu0
    %v508 = vadd.f32 %v138, %v507
    %v509 = vpop.f32.mrb[0].mxu0
    %v510 = vadd.f32 %v134, %v509
    %v511 = vpop.f32.mrb[0].mxu0
    %v512 = vadd.f32 %v138, %v511
    %513 = vmatprep.mubr.bf16.mxu0 0
    %514 = vmatmul.mubr.bf16.gmra.mrb[0].mxu0 %v303
    %v515 = vpop.f32.mrb[0].mxu0
    %v516 = vadd.f32 %v134, %v515
    %v517 = vpop.f32.mrb[0].mxu0
    %v518 = vadd.f32 %v138, %v517
    %v519 = vpop.f32.mrb[0].mxu0
    %v520 = vadd.f32 %v134, %v519
    %v521 = vpop.f32.mrb[0].mxu0
    %v522 = vadd.f32 %v138, %v521
    %523 = vmatprep.mubr.bf16.mxu0 0
    %524 = vmatmul.mubr.bf16.gmra.mrb[0].mxu0 %v306
    %v525 = vpop.f32.mrb[0].mxu0
    %v526 = vadd.f32 %v134, %v525
    %v527 = vpop.f32.mrb[0].mxu0
    %v528 = vadd.f32 %v138, %v527
    %v529 = vpop.f32.mrb[0].mxu0
    %v530 = vadd.f32 %v134, %v529
    %v531 = vpop.f32.mrb[0].mxu0
    %v532 = vadd.f32 %v138, %v531
    %533 = vdwg.mxu0
    %534 = vmatprep.subr.bf16.mxu0 %v256
    %535 = vmatpush1.bf16.msra.mxu0 %v255
    %536 = vmatprep.subr.bf16.mxu0 %v264
    %537 = vmatpush1.bf16.msra.mxu0 %v263
    %538 = vmatprep.subr.bf16.mxu0 0
    %539 = vmatpush1.bf16.msra.mxu0 0
    %540 = vmatprep.subr.bf16.mxu0 0
    %541 = vmatpush1.bf16.msra.mxu0 0
    %542 = vmatprep.subr.bf16.mxu0 0
    %543 = vmatpush1.bf16.msra.mxu0 0
    %544 = vmatprep.subr.bf16.mxu0 0
    %545 = vmatpush1.bf16.msra.mxu0 0
    %546 = vmatprep.subr.bf16.mxu0 0
    %547 = vmatpush1.bf16.msra.mxu0 0
    %548 = vmatprep.subr.bf16.mxu0 0
    %549 = vmatpush1.bf16.msra.mxu0 0
    %550 = vmatprep.subr.bf16.mxu0 0
    %551 = vmatpush1.bf16.msra.mxu0 0
    %552 = vmatprep.subr.bf16.mxu0 0
    %553 = vmatpush1.bf16.msra.mxu0 0
    %554 = vmatprep.subr.bf16.mxu0 0
    %555 = vmatpush1.bf16.msra.mxu0 0
    %556 = vmatprep.subr.bf16.mxu0 0
    %557 = vmatpush1.bf16.msra.mxu0 0
    %558 = vmatprep.subr.bf16.mxu0 0
    %559 = vmatpush1.bf16.msra.mxu0 0
    %560 = vmatprep.subr.bf16.mxu0 0
    %561 = vmatpush1.bf16.msra.mxu0 0
    %562 = vmatprep.subr.bf16.mxu0 0
    %563 = vmatpush1.bf16.msra.mxu0 0
    %564 = vmatprep.subr.bf16.mxu0 0
    %565 = vmatpush1.bf16.msra.mxu0 0
    %566 = vmatprep.mubr.bf16.mxu0 0
    %567 = vmatmul.mubr.bf16.gmra.mrb[0].mxu0 %v285
    %v568 = vpop.f32.mrb[0].mxu0
    %v569 = vadd.f32 %v142, %v568
    %v570 = vpop.f32.mrb[0].mxu0
    %v571 = vadd.f32 %v146, %v570
    %v572 = vpop.f32.mrb[0].mxu0
    %v573 = vadd.f32 %v142, %v572
    %v574 = vpop.f32.mrb[0].mxu0
    %v575 = vadd.f32 %v146, %v574
    %576 = vmatprep.mubr.bf16.mxu0 0
    %577 = vmatmul.mubr.bf16.gmra.mrb[0].mxu0 %v288
    %v578 = vpop.f32.mrb[0].mxu0
    %v579 = vadd.f32 %v142, %v578
    %v580 = vpop.f32.mrb[0].mxu0
    %v581 = vadd.f32 %v146, %v580
    %v582 = vpop.f32.mrb[0].mxu0
    %v583 = vadd.f32 %v142, %v582
    %v584 = vpop.f32.mrb[0].mxu0
    %v585 = vadd.f32 %v146, %v584
    %586 = vmatprep.mubr.bf16.mxu0 0
    %587 = vmatmul.mubr.bf16.gmra.mrb[0].mxu0 %v291
    %v588 = vpop.f32.mrb[0].mxu0
    %v589 = vadd.f32 %v142, %v588
    %v590 = vpop.f32.mrb[0].mxu0
    %v591 = vadd.f32 %v146, %v590
    %v592 = vpop.f32.mrb[0].mxu0
    %v593 = vadd.f32 %v142, %v592
    %v594 = vpop.f32.mrb[0].mxu0
    %v595 = vadd.f32 %v146, %v594
    %596 = vmatprep.mubr.bf16.mxu0 0
    %597 = vmatmul.mubr.bf16.gmra.mrb[0].mxu0 %v294
    %v598 = vpop.f32.mrb[0].mxu0
    %v599 = vadd.f32 %v142, %v598
    %v600 = vpop.f32.mrb[0].mxu0
    %v601 = vadd.f32 %v146, %v600
    %v602 = vpop.f32.mrb[0].mxu0
    %v603 = vadd.f32 %v142, %v602
    %v604 = vpop.f32.mrb[0].mxu0
    %v605 = vadd.f32 %v146, %v604
    %606 = vmatprep.mubr.bf16.mxu0 0
    %607 = vmatmul.mubr.bf16.gmra.mrb[0].mxu0 %v297
    %v608 = vpop.f32.mrb[0].mxu0
    %v609 = vadd.f32 %v142, %v608
    %v610 = vpop.f32.mrb[0].mxu0
    %v611 = vadd.f32 %v146, %v610
    %v612 = vpop.f32.mrb[0].mxu0
    %v613 = vadd.f32 %v142, %v612
    %v614 = vpop.f32.mrb[0].mxu0
    %v615 = vadd.f32 %v146, %v614
    %616 = vmatprep.mubr.bf16.mxu0 0
    %617 = vmatmul.mubr.bf16.gmra.mrb[0].mxu0 %v300
    %v618 = vpop.f32.mrb[0].mxu0
    %v619 = vadd.f32 %v142, %v618
    %v620 = vpop.f32.mrb[0].mxu0
    %v621 = vadd.f32 %v146, %v620
    %v622 = vpop.f32.mrb[0].mxu0
    %v623 = vadd.f32 %v142, %v622
    %v624 = vpop.f32.mrb[0].mxu0
    %v625 = vadd.f32 %v146, %v624
    %626 = vmatprep.mubr.bf16.mxu0 0
    %627 = vmatmul.mubr.bf16.gmra.mrb[0].mxu0 %v303
    %v628 = vpop.f32.mrb[0].mxu0
    %v629 = vadd.f32 %v142, %v628
    %v630 = vpop.f32.mrb[0].mxu0
    %v631 = vadd.f32 %v146, %v630
    %v632 = vpop.f32.mrb[0].mxu0
    %v633 = vadd.f32 %v142, %v632
    %v634 = vpop.f32.mrb[0].mxu0
    %v635 = vadd.f32 %v146, %v634
    %636 = vmatprep.mubr.bf16.mxu0 0
    %637 = vmatmul.mubr.bf16.gmra.mrb[0].mxu0 %v306
    %v638 = vpop.f32.mrb[0].mxu0
    %v639 = vadd.f32 %v142, %v638
    %v640 = vpop.f32.mrb[0].mxu0
    %v641 = vadd.f32 %v146, %v640
    %v642 = vpop.f32.mrb[0].mxu0
    %v643 = vadd.f32 %v142, %v642
    %v644 = vpop.f32.mrb[0].mxu0
    %v645 = vadd.f32 %v146, %v644
    %646 = vdwg.mxu0
    %647 = vmatprep.subr.bf16.mxu0 %v258
    %648 = vmatpush1.bf16.msra.mxu0 %v257
    %649 = vmatprep.subr.bf16.mxu0 %v266
    %650 = vmatpush1.bf16.msra.mxu0 %v265
    %651 = vmatprep.subr.bf16.mxu0 0
    %652 = vmatpush1.bf16.msra.mxu0 0
    %653 = vmatprep.subr.bf16.mxu0 0
    %654 = vmatpush1.bf16.msra.mxu0 0
    %655 = vmatprep.subr.bf16.mxu0 0
    %656 = vmatpush1.bf16.msra.mxu0 0
    %657 = vmatprep.subr.bf16.mxu0 0
    %658 = vmatpush1.bf16.msra.mxu0 0
    %659 = vmatprep.subr.bf16.mxu0 0
    %660 = vmatpush1.bf16.msra.mxu0 0
    %661 = vmatprep.subr.bf16.mxu0 0
    %662 = vmatpush1.bf16.msra.mxu0 0
    %663 = vmatprep.subr.bf16.mxu0 0
    %664 = vmatpush1.bf16.msra.mxu0 0
    %665 = vmatprep.subr.bf16.mxu0 0
    %666 = vmatpush1.bf16.msra.mxu0 0
    %667 = vmatprep.subr.bf16.mxu0 0
    %668 = vmatpush1.bf16.msra.mxu0 0
    %669 = vmatprep.subr.bf16.mxu0 0
    %670 = vmatpush1.bf16.msra.mxu0 0
    %671 = vmatprep.subr.bf16.mxu0 0
    %672 = vmatpush1.bf16.msra.mxu0 0
    %673 = vmatprep.subr.bf16.mxu0 0
    %674 = vmatpush1.bf16.msra.mxu0 0
    %675 = vmatprep.subr.bf16.mxu0 0
    %676 = vmatpush1.bf16.msra.mxu0 0
    %677 = vmatprep.subr.bf16.mxu0 0
    %678 = vmatpush1.bf16.msra.mxu0 0
    %679 = vmatprep.mubr.bf16.mxu0 0
    %680 = vmatmul.mubr.bf16.gmra.mrb[0].mxu0 %v285
    %v681 = vpop.f32.mrb[0].mxu0
    %v682 = vadd.f32 %v150, %v681
    %v683 = vpop.f32.mrb[0].mxu0
    %v684 = vadd.f32 %v154, %v683
    %v685 = vpop.f32.mrb[0].mxu0
    %v686 = vadd.f32 %v150, %v685
    %v687 = vpop.f32.mrb[0].mxu0
    %v688 = vadd.f32 %v154, %v687
    %689 = vmatprep.mubr.bf16.mxu0 0
    %690 = vmatmul.mubr.bf16.gmra.mrb[0].mxu0 %v288
    %v691 = vpop.f32.mrb[0].mxu0
    %v692 = vadd.f32 %v150, %v691
    %v693 = vpop.f32.mrb[0].mxu0
    %v694 = vadd.f32 %v154, %v693
    %v695 = vpop.f32.mrb[0].mxu0
    %v696 = vadd.f32 %v150, %v695
    %v697 = vpop.f32.mrb[0].mxu0
    %v698 = vadd.f32 %v154, %v697
    %699 = vmatprep.mubr.bf16.mxu0 0
    %700 = vmatmul.mubr.bf16.gmra.mrb[0].mxu0 %v291
    %v701 = vpop.f32.mrb[0].mxu0
    %v702 = vadd.f32 %v150, %v701
    %v703 = vpop.f32.mrb[0].mxu0
    %v704 = vadd.f32 %v154, %v703
    %v705 = vpop.f32.mrb[0].mxu0
    %v706 = vadd.f32 %v150, %v705
    %v707 = vpop.f32.mrb[0].mxu0
    %v708 = vadd.f32 %v154, %v707
    %709 = vmatprep.mubr.bf16.mxu0 0
    %710 = vmatmul.mubr.bf16.gmra.mrb[0].mxu0 %v294
    %v711 = vpop.f32.mrb[0].mxu0
    %v712 = vadd.f32 %v150, %v711
    %v713 = vpop.f32.mrb[0].mxu0
    %v714 = vadd.f32 %v154, %v713
    %v715 = vpop.f32.mrb[0].mxu0
    %v716 = vadd.f32 %v150, %v715
    %v717 = vpop.f32.mrb[0].mxu0
    %v718 = vadd.f32 %v154, %v717
    %719 = vmatprep.mubr.bf16.mxu0 0
    %720 = vmatmul.mubr.bf16.gmra.mrb[0].mxu0 %v297
    %v721 = vpop.f32.mrb[0].mxu0
    %v722 = vadd.f32 %v150, %v721
    %v723 = vpop.f32.mrb[0].mxu0
    %v724 = vadd.f32 %v154, %v723
    %v725 = vpop.f32.mrb[0].mxu0
    %v726 = vadd.f32 %v150, %v725
    %v727 = vpop.f32.mrb[0].mxu0
    %v728 = vadd.f32 %v154, %v727
    %729 = vmatprep.mubr.bf16.mxu0 0
    %730 = vmatmul.mubr.bf16.gmra.mrb[0].mxu0 %v300
    %v731 = vpop.f32.mrb[0].mxu0
    %v732 = vadd.f32 %v150, %v731
    %v733 = vpop.f32.mrb[0].mxu0
    %v734 = vadd.f32 %v154, %v733
    %v735 = vpop.f32.mrb[0].mxu0
    %v736 = vadd.f32 %v150, %v735
    %v737 = vpop.f32.mrb[0].mxu0
    %v738 = vadd.f32 %v154, %v737
    %739 = vmatprep.mubr.bf16.mxu0 0
    %740 = vmatmul.mubr.bf16.gmra.mrb[0].mxu0 %v303
    %v741 = vpop.f32.mrb[0].mxu0
    %v742 = vadd.f32 %v150, %v741
    %v743 = vpop.f32.mrb[0].mxu0
    %v744 = vadd.f32 %v154, %v743
    %v745 = vpop.f32.mrb[0].mxu0
    %v746 = vadd.f32 %v150, %v745
    %v747 = vpop.f32.mrb[0].mxu0
    %v748 = vadd.f32 %v154, %v747
    %749 = vmatprep.mubr.bf16.mxu0 0
    %750 = vmatmul.mubr.bf16.gmra.mrb[0].mxu0 %v306
    %v751 = vpop.f32.mrb[0].mxu0
    %v752 = vadd.f32 %v150, %v751
    %v753 = vpop.f32.mrb[0].mxu0
    %v754 = vadd.f32 %v154, %v753
    %v755 = vpop.f32.mrb[0].mxu0
    %v756 = vadd.f32 %v150, %v755
    %v757 = vpop.f32.mrb[0].mxu0
    %v758 = vadd.f32 %v154, %v757
    %759 = vdwg.mxu0
    %v760 = vmax.f32 %v343, 0.0
    %v761 = vmax.f32 %v345, 0.0
    %v762 = vmax.f32 %v456, 0.0
    %v763 = vmax.f32 %v458, 0.0
    %v764 = vmax.f32 %v569, 0.0
    %v765 = vmax.f32 %v571, 0.0
    %v766 = vmax.f32 %v682, 0.0
    %v767 = vmax.f32 %v684, 0.0
    %v768 = vmax.f32 %v347, 0.0
    %v769 = vmax.f32 %v349, 0.0
    %v770 = vmax.f32 %v460, 0.0
    %v771 = vmax.f32 %v462, 0.0
    %v772 = vmax.f32 %v573, 0.0
    %v773 = vmax.f32 %v575, 0.0
    %v774 = vmax.f32 %v686, 0.0
    %v775 = vmax.f32 %v688, 0.0
    %v776 = vmax.f32 %v353, 0.0
    %v777 = vmax.f32 %v355, 0.0
    %v778 = vmax.f32 %v466, 0.0
    %v779 = vmax.f32 %v468, 0.0
    %v780 = vmax.f32 %v579, 0.0
    %v781 = vmax.f32 %v581, 0.0
    %v782 = vmax.f32 %v692, 0.0
    %v783 = vmax.f32 %v694, 0.0
    %v784 = vmax.f32 %v357, 0.0
    %v785 = vmax.f32 %v359, 0.0
    %v786 = vmax.f32 %v470, 0.0
    %v787 = vmax.f32 %v472, 0.0
    %v788 = vmax.f32 %v583, 0.0
    %v789 = vmax.f32 %v585, 0.0
    %v790 = vmax.f32 %v696, 0.0
    %v791 = vmax.f32 %v698, 0.0
    %v792 = vmax.f32 %v363, 0.0
    %v793 = vmax.f32 %v365, 0.0
    %v794 = vmax.f32 %v476, 0.0
    %v795 = vmax.f32 %v478, 0.0
    %v796 = vmax.f32 %v589, 0.0
    %v797 = vmax.f32 %v591, 0.0
    %v798 = vmax.f32 %v702, 0.0
    %v799 = vmax.f32 %v704, 0.0
    %v800 = vmax.f32 %v367, 0.0
    %v801 = vmax.f32 %v369, 0.0
    %v802 = vmax.f32 %v480, 0.0
    %v803 = vmax.f32 %v482, 0.0
    %v804 = vmax.f32 %v593, 0.0
    %v805 = vmax.f32 %v595, 0.0
    %v806 = vmax.f32 %v706, 0.0
    %v807 = vmax.f32 %v708, 0.0
    %v808 = vmax.f32 %v373, 0.0
    %v809 = vmax.f32 %v375, 0.0
    %v810 = vmax.f32 %v486, 0.0
    %v811 = vmax.f32 %v488, 0.0
    %v812 = vmax.f32 %v599, 0.0
    %v813 = vmax.f32 %v601, 0.0
    %v814 = vmax.f32 %v712, 0.0
    %v815 = vmax.f32 %v714, 0.0
    %v816 = vmax.f32 %v377, 0.0
    %v817 = vmax.f32 %v379, 0.0
    %v818 = vmax.f32 %v490, 0.0
    %v819 = vmax.f32 %v492, 0.0
    %v820 = vmax.f32 %v603, 0.0
    %v821 = vmax.f32 %v605, 0.0
    %v822 = vmax.f32 %v716, 0.0
    %v823 = vmax.f32 %v718, 0.0
    %v824 = vmax.f32 %v383, 0.0
    %v825 = vmax.f32 %v385, 0.0
    %v826 = vmax.f32 %v496, 0.0
    %v827 = vmax.f32 %v498, 0.0
    %v828 = vmax.f32 %v609, 0.0
    %v829 = vmax.f32 %v611, 0.0
    %v830 = vmax.f32 %v722, 0.0
    %v831 = vmax.f32 %v724, 0.0
    %v832 = vmax.f32 %v387, 0.0
    %v833 = vmax.f32 %v389, 0.0
    %v834 = vmax.f32 %v500, 0.0
    %v835 = vmax.f32 %v502, 0.0
    %v836 = vmax.f32 %v613, 0.0
    %v837 = vmax.f32 %v615, 0.0
    %v838 = vmax.f32 %v726, 0.0
    %v839 = vmax.f32 %v728, 0.0
    %v840 = vmax.f32 %v393, 0.0
    %v841 = vmax.f32 %v395, 0.0
    %v842 = vmax.f32 %v506, 0.0
    %v843 = vmax.f32 %v508, 0.0
    %v844 = vmax.f32 %v619, 0.0
    %v845 = vmax.f32 %v621, 0.0
    %v846 = vmax.f32 %v732, 0.0
    %v847 = vmax.f32 %v734, 0.0
    %v848 = vmax.f32 %v397, 0.0
    %v849 = vmax.f32 %v399, 0.0
    %v850 = vmax.f32 %v510, 0.0
    %v851 = vmax.f32 %v512, 0.0
    %v852 = vmax.f32 %v623, 0.0
    %v853 = vmax.f32 %v625, 0.0
    %v854 = vmax.f32 %v736, 0.0
    %v855 = vmax.f32 %v738, 0.0
    %v856 = vmax.f32 %v403, 0.0
    %v857 = vmax.f32 %v405, 0.0
    %v858 = vmax.f32 %v516, 0.0
    %v859 = vmax.f32 %v518, 0.0
    %v860 = vmax.f32 %v629, 0.0
    %v861 = vmax.f32 %v631, 0.0
    %v862 = vmax.f32 %v742, 0.0
    %v863 = vmax.f32 %v744, 0.0
    %v864 = vmax.f32 %v407, 0.0
    %v865 = vmax.f32 %v409, 0.0
    %v866 = vmax.f32 %v520, 0.0
    %v867 = vmax.f32 %v522, 0.0
    %v868 = vmax.f32 %v633, 0.0
    %v869 = vmax.f32 %v635, 0.0
    %v870 = vmax.f32 %v746, 0.0
    %v871 = vmax.f32 %v748, 0.0
    %v872 = vmax.f32 %v413, 0.0
    %v873 = vmax.f32 %v415, 0.0
    %v874 = vmax.f32 %v526, 0.0
    %v875 = vmax.f32 %v528, 0.0
    %v876 = vmax.f32 %v639, 0.0
    %v877 = vmax.f32 %v641, 0.0
    %v878 = vmax.f32 %v752, 0.0
    %v879 = vmax.f32 %v754, 0.0
    %v880 = vmax.f32 %v417, 0.0
    %v881 = vmax.f32 %v419, 0.0
    %v882 = vmax.f32 %v530, 0.0
    %v883 = vmax.f32 %v532, 0.0
    %v884 = vmax.f32 %v643, 0.0
    %v885 = vmax.f32 %v645, 0.0
    %v886 = vmax.f32 %v756, 0.0
    %v887 = vmax.f32 %v758, 0.0
    %v888 = vpack.c.bf16 %v768, %v760
    %v889 = vpack.c.bf16 %v769, %v761
    %v890 = vpack.c.bf16 %v770, %v762
    %v891 = vpack.c.bf16 %v771, %v763
    %v892 = vpack.c.bf16 %v772, %v764
    %v893 = vpack.c.bf16 %v773, %v765
    %v894 = vpack.c.bf16 %v774, %v766
    %v895 = vpack.c.bf16 %v775, %v767
    %v896 = vpack.c.bf16 %v784, %v776
    %v897 = vpack.c.bf16 %v785, %v777
    %v898 = vpack.c.bf16 %v786, %v778
    %v899 = vpack.c.bf16 %v787, %v779
    %v900 = vpack.c.bf16 %v788, %v780
    %v901 = vpack.c.bf16 %v789, %v781
    %v902 = vpack.c.bf16 %v790, %v782
    %v903 = vpack.c.bf16 %v791, %v783
    %v904 = vpack.c.bf16 %v800, %v792
    %v905 = vpack.c.bf16 %v801, %v793
    %v906 = vpack.c.bf16 %v802, %v794
    %v907 = vpack.c.bf16 %v803, %v795
    %v908 = vpack.c.bf16 %v804, %v796
    %v909 = vpack.c.bf16 %v805, %v797
    %v910 = vpack.c.bf16 %v806, %v798
    %v911 = vpack.c.bf16 %v807, %v799
    %v912 = vpack.c.bf16 %v816, %v808
    %v913 = vpack.c.bf16 %v817, %v809
    %v914 = vpack.c.bf16 %v818, %v810
    %v915 = vpack.c.bf16 %v819, %v811
    %v916 = vpack.c.bf16 %v820, %v812
    %v917 = vpack.c.bf16 %v821, %v813
    %v918 = vpack.c.bf16 %v822, %v814
    %v919 = vpack.c.bf16 %v823, %v815
    %v920 = vpack.c.bf16 %v832, %v824
    %v921 = vpack.c.bf16 %v833, %v825
    %v922 = vpack.c.bf16 %v834, %v826
    %v923 = vpack.c.bf16 %v835, %v827
    %v924 = vpack.c.bf16 %v836, %v828
    %v925 = vpack.c.bf16 %v837, %v829
    %v926 = vpack.c.bf16 %v838, %v830
    %v927 = vpack.c.bf16 %v839, %v831
    %v928 = vpack.c.bf16 %v848, %v840
    %v929 = vpack.c.bf16 %v849, %v841
    %v930 = vpack.c.bf16 %v850, %v842
    %v931 = vpack.c.bf16 %v851, %v843
    %v932 = vpack.c.bf16 %v852, %v844
    %v933 = vpack.c.bf16 %v853, %v845
    %v934 = vpack.c.bf16 %v854, %v846
    %v935 = vpack.c.bf16 %v855, %v847
    %v936 = vpack.c.bf16 %v864, %v856
    %v937 = vpack.c.bf16 %v865, %v857
    %v938 = vpack.c.bf16 %v866, %v858
    %v939 = vpack.c.bf16 %v867, %v859
    %v940 = vpack.c.bf16 %v868, %v860
    %v941 = vpack.c.bf16 %v869, %v861
    %v942 = vpack.c.bf16 %v870, %v862
    %v943 = vpack.c.bf16 %v871, %v863
    %v944 = vpack.c.bf16 %v880, %v872
    %v945 = vpack.c.bf16 %v881, %v873
    %v946 = vpack.c.bf16 %v882, %v874
    %v947 = vpack.c.bf16 %v883, %v875
    %v948 = vpack.c.bf16 %v884, %v876
    %v949 = vpack.c.bf16 %v885, %v877
    %v950 = vpack.c.bf16 %v886, %v878
    %v951 = vpack.c.bf16 %v887, %v879
    %v952 = vld [vmem:[#allocation5] sm:$0xff]
    %v953 = vld [vmem:[#allocation5 + $0x8] sm:$0xff]
    %v954 = vld [vmem:[#allocation5 + $0x10] sm:$0xff]
    %v955 = vld [vmem:[#allocation5 + $0x18] sm:$0xff]
    %v956 = vld [vmem:[#allocation5 + $0x20] sm:$0xff]
    %v957 = vld [vmem:[#allocation5 + $0x28] sm:$0xff]
    %v958 = vld [vmem:[#allocation5 + $0x30] sm:$0xff]
    %v959 = vld [vmem:[#allocation5 + $0x38] sm:$0xff]
    %v960 = vld [vmem:[#allocation5 + $0x40] sm:$0xff]
    %v961 = vld [vmem:[#allocation5 + $0x48] sm:$0xff]
    %v962 = vld [vmem:[#allocation5 + $0x50] sm:$0xff]
    %v963 = vld [vmem:[#allocation5 + $0x58] sm:$0xff]
    %v964 = vld [vmem:[#allocation5 + $0x60] sm:$0xff]
    %v965 = vld [vmem:[#allocation5 + $0x68] sm:$0xff]
    %v966 = vld [vmem:[#allocation5 + $0x70] sm:$0xff]
    %v967 = vld [vmem:[#allocation5 + $0x78] sm:$0xff]
    %v968 = vld [vmem:[#allocation5 + $0x80] sm:$0xff]
    %v969 = vld [vmem:[#allocation5 + $0x88] sm:$0xff]
    %v970 = vld [vmem:[#allocation5 + $0x90] sm:$0xff]
    %v971 = vld [vmem:[#allocation5 + $0x98] sm:$0xff]
    %v972 = vld [vmem:[#allocation5 + $0xa0] sm:$0xff]
    %v973 = vld [vmem:[#allocation5 + $0xa8] sm:$0xff]
    %v974 = vld [vmem:[#allocation5 + $0xb0] sm:$0xff]
    %v975 = vld [vmem:[#allocation5 + $0xb8] sm:$0xff]
    %v976 = vld [vmem:[#allocation5 + $0xc0] sm:$0xff]
    %v977 = vld [vmem:[#allocation5 + $0xc8] sm:$0xff]
    %v978 = vld [vmem:[#allocation5 + $0xd0] sm:$0xff]
    %v979 = vld [vmem:[#allocation5 + $0xd8] sm:$0xff]
    %v980 = vld [vmem:[#allocation5 + $0xe0] sm:$0xff]
    %v981 = vld [vmem:[#allocation5 + $0xe8] sm:$0xff]
    %v982 = vld [vmem:[#allocation5 + $0xf0] sm:$0xff]
    %v983 = vld [vmem:[#allocation5 + $0xf8] sm:$0xff]
    %v984 = vld [vmem:[#allocation5 + $0x100] sm:$0xff]
    %v985 = vld [vmem:[#allocation5 + $0x108] sm:$0xff]
    %v986 = vld [vmem:[#allocation5 + $0x110] sm:$0xff]
    %v987 = vld [vmem:[#allocation5 + $0x118] sm:$0xff]
    %v988 = vld [vmem:[#allocation5 + $0x120] sm:$0xff]
    %v989 = vld [vmem:[#allocation5 + $0x128] sm:$0xff]
    %v990 = vld [vmem:[#allocation5 + $0x130] sm:$0xff]
    %v991 = vld [vmem:[#allocation5 + $0x138] sm:$0xff]
    %v992 = vld [vmem:[#allocation5 + $0x140] sm:$0xff]
    %v993 = vld [vmem:[#allocation5 + $0x148] sm:$0xff]
    %v994 = vld [vmem:[#allocation5 + $0x150] sm:$0xff]
    %v995 = vld [vmem:[#allocation5 + $0x158] sm:$0xff]
    %v996 = vld [vmem:[#allocation5 + $0x160] sm:$0xff]
    %v997 = vld [vmem:[#allocation5 + $0x168] sm:$0xff]
    %v998 = vld [vmem:[#allocation5 + $0x170] sm:$0xff]
    %v999 = vld [vmem:[#allocation5 + $0x178] sm:$0xff]
    %v1000 = vld [vmem:[#allocation5 + $0x180] sm:$0xff]
    %v1001 = vld [vmem:[#allocation5 + $0x188] sm:$0xff]
    %v1002 = vld [vmem:[#allocation5 + $0x190] sm:$0xff]
    %v1003 = vld [vmem:[#allocation5 + $0x198] sm:$0xff]
    %v1004 = vld [vmem:[#allocation5 + $0x1a0] sm:$0xff]
    %v1005 = vld [vmem:[#allocation5 + $0x1a8] sm:$0xff]
    %v1006 = vld [vmem:[#allocation5 + $0x1b0] sm:$0xff]
    %v1007 = vld [vmem:[#allocation5 + $0x1b8] sm:$0xff]
    %v1008 = vld [vmem:[#allocation5 + $0x1c0] sm:$0xff]
    %v1009 = vld [vmem:[#allocation5 + $0x1c8] sm:$0xff]
    %v1010 = vld [vmem:[#allocation5 + $0x1d0] sm:$0xff]
    %v1011 = vld [vmem:[#allocation5 + $0x1d8] sm:$0xff]
    %v1012 = vld [vmem:[#allocation5 + $0x1e0] sm:$0xff]
    %v1013 = vld [vmem:[#allocation5 + $0x1e8] sm:$0xff]
    %v1014 = vld [vmem:[#allocation5 + $0x1f0] sm:$0xff]
    %v1015 = vld [vmem:[#allocation5 + $0x1f8] sm:$0xff]
    %v1016 = vld [vmem:[#allocation5 + $0x200] sm:$0xff]
    %v1017 = vld [vmem:[#allocation5 + $0x208] sm:$0xff]
    %v1018 = vld [vmem:[#allocation5 + $0x210] sm:$0xff]
    %v1019 = vld [vmem:[#allocation5 + $0x218] sm:$0xff]
    %v1020 = vld [vmem:[#allocation5 + $0x220] sm:$0xff]
    %v1021 = vld [vmem:[#allocation5 + $0x228] sm:$0xff]
    %v1022 = vld [vmem:[#allocation5 + $0x230] sm:$0xff]
    %v1023 = vld [vmem:[#allocation5 + $0x238] sm:$0xff]
    %v1024 = vld [vmem:[#allocation5 + $0x240] sm:$0xff]
    %v1025 = vld [vmem:[#allocation5 + $0x248] sm:$0xff]
    %v1026 = vld [vmem:[#allocation5 + $0x250] sm:$0xff]
    %v1027 = vld [vmem:[#allocation5 + $0x258] sm:$0xff]
    %v1028 = vld [vmem:[#allocation5 + $0x260] sm:$0xff]
    %v1029 = vld [vmem:[#allocation5 + $0x268] sm:$0xff]
    %v1030 = vld [vmem:[#allocation5 + $0x270] sm:$0xff]
    %v1031 = vld [vmem:[#allocation5 + $0x278] sm:$0xff]
    %v1032 = vld [vmem:[#allocation5 + $0x280] sm:$0xff]
    %v1033 = vld [vmem:[#allocation5 + $0x288] sm:$0xff]
    %v1034 = vld [vmem:[#allocation5 + $0x290] sm:$0xff]
    %v1035 = vld [vmem:[#allocation5 + $0x298] sm:$0xff]
    %v1036 = vld [vmem:[#allocation5 + $0x2a0] sm:$0xff]
    %v1037 = vld [vmem:[#allocation5 + $0x2a8] sm:$0xff]
    %v1038 = vld [vmem:[#allocation5 + $0x2b0] sm:$0xff]
    %v1039 = vld [vmem:[#allocation5 + $0x2b8] sm:$0xff]
    %v1040 = vld [vmem:[#allocation5 + $0x2c0] sm:$0xff]
    %v1041 = vld [vmem:[#allocation5 + $0x2c8] sm:$0xff]
    %v1042 = vld [vmem:[#allocation5 + $0x2d0] sm:$0xff]
    %v1043 = vld [vmem:[#allocation5 + $0x2d8] sm:$0xff]
    %v1044 = vld [vmem:[#allocation5 + $0x2e0] sm:$0xff]
    %v1045 = vld [vmem:[#allocation5 + $0x2e8] sm:$0xff]
    %v1046 = vld [vmem:[#allocation5 + $0x2f0] sm:$0xff]
    %v1047 = vld [vmem:[#allocation5 + $0x2f8] sm:$0xff]
    %v1048 = vld [vmem:[#allocation5 + $0x300] sm:$0xff]
    %v1049 = vld [vmem:[#allocation5 + $0x308] sm:$0xff]
    %v1050 = vld [vmem:[#allocation5 + $0x310] sm:$0xff]
    %v1051 = vld [vmem:[#allocation5 + $0x318] sm:$0xff]
    %v1052 = vld [vmem:[#allocation5 + $0x320] sm:$0xff]
    %v1053 = vld [vmem:[#allocation5 + $0x328] sm:$0xff]
    %v1054 = vld [vmem:[#allocation5 + $0x330] sm:$0xff]
    %v1055 = vld [vmem:[#allocation5 + $0x338] sm:$0xff]
    %v1056 = vld [vmem:[#allocation5 + $0x340] sm:$0xff]
    %v1057 = vld [vmem:[#allocation5 + $0x348] sm:$0xff]
    %v1058 = vld [vmem:[#allocation5 + $0x350] sm:$0xff]
    %v1059 = vld [vmem:[#allocation5 + $0x358] sm:$0xff]
    %v1060 = vld [vmem:[#allocation5 + $0x360] sm:$0xff]
    %v1061 = vld [vmem:[#allocation5 + $0x368] sm:$0xff]
    %v1062 = vld [vmem:[#allocation5 + $0x370] sm:$0xff]
    %v1063 = vld [vmem:[#allocation5 + $0x378] sm:$0xff]
    %v1064 = vld [vmem:[#allocation5 + $0x380] sm:$0xff]
    %v1065 = vld [vmem:[#allocation5 + $0x388] sm:$0xff]
    %v1066 = vld [vmem:[#allocation5 + $0x390] sm:$0xff]
    %v1067 = vld [vmem:[#allocation5 + $0x398] sm:$0xff]
    %v1068 = vld [vmem:[#allocation5 + $0x3a0] sm:$0xff]
    %v1069 = vld [vmem:[#allocation5 + $0x3a8] sm:$0xff]
    %v1070 = vld [vmem:[#allocation5 + $0x3b0] sm:$0xff]
    %v1071 = vld [vmem:[#allocation5 + $0x3b8] sm:$0xff]
    %v1072 = vld [vmem:[#allocation5 + $0x3c0] sm:$0xff]
    %v1073 = vld [vmem:[#allocation5 + $0x3c8] sm:$0xff]
    %v1074 = vld [vmem:[#allocation5 + $0x3d0] sm:$0xff]
    %v1075 = vld [vmem:[#allocation5 + $0x3d8] sm:$0xff]
    %v1076 = vld [vmem:[#allocation5 + $0x3e0] sm:$0xff]
    %v1077 = vld [vmem:[#allocation5 + $0x3e8] sm:$0xff]
    %v1078 = vld [vmem:[#allocation5 + $0x3f0] sm:$0xff]
    %v1079 = vld [vmem:[#allocation5 + $0x3f8] sm:$0xff]
    %v1080 = vld [vmem:[%s4] sm:$0x3]
    %v1082 = vlaneseq
    %v1083 = vshrl.u32 %v1082, 7
    %v1084 = vsub.s32 0, %v1083
    %v1085 = vrot.slane %v1080, %v1084
    %v1086 = vlaneseq
    %v1087 = vshrl.u32 %v1086, 7
    %v1088 = vsub.s32 1, %v1087
    %v1089 = vrot.slane %v1080, %v1088
    %v1220 = vunpack.c.l.b16 %v952
    %v1221 = vunpack.c.h.b16 %v952
    %v1222 = vunpack.c.l.b16 %v953
    %v1223 = vunpack.c.h.b16 %v953
    %v1224 = vunpack.c.l.b16 %v954
    %v1225 = vunpack.c.h.b16 %v954
    %v1226 = vunpack.c.l.b16 %v955
    %v1227 = vunpack.c.h.b16 %v955
    %v1228 = vunpack.c.l.b16 %v956
    %v1229 = vunpack.c.h.b16 %v956
    %v1230 = vunpack.c.l.b16 %v957
    %v1231 = vunpack.c.h.b16 %v957
    %v1232 = vunpack.c.l.b16 %v958
    %v1233 = vunpack.c.h.b16 %v958
    %v1234 = vunpack.c.l.b16 %v959
    %v1235 = vunpack.c.h.b16 %v959
    %v1236 = vunpack.c.l.b16 %v960
    %v1237 = vunpack.c.h.b16 %v960
    %v1238 = vunpack.c.l.b16 %v961
    %v1239 = vunpack.c.h.b16 %v961
    %v1240 = vunpack.c.l.b16 %v962
    %v1241 = vunpack.c.h.b16 %v962
    %v1242 = vunpack.c.l.b16 %v963
    %v1243 = vunpack.c.h.b16 %v963
    %v1244 = vunpack.c.l.b16 %v964
    %v1245 = vunpack.c.h.b16 %v964
    %v1246 = vunpack.c.l.b16 %v965
    %v1247 = vunpack.c.h.b16 %v965
    %v1248 = vunpack.c.l.b16 %v966
    %v1249 = vunpack.c.h.b16 %v966
    %v1250 = vunpack.c.l.b16 %v967
    %v1251 = vunpack.c.h.b16 %v967
    %v1252 = vunpack.c.l.b16 %v968
    %v1253 = vunpack.c.h.b16 %v968
    %v1254 = vunpack.c.l.b16 %v969
    %v1255 = vunpack.c.h.b16 %v969
    %v1256 = vunpack.c.l.b16 %v970
    %v1257 = vunpack.c.h.b16 %v970
    %v1258 = vunpack.c.l.b16 %v971
    %v1259 = vunpack.c.h.b16 %v971
    %v1260 = vunpack.c.l.b16 %v972
    %v1261 = vunpack.c.h.b16 %v972
    %v1262 = vunpack.c.l.b16 %v973
    %v1263 = vunpack.c.h.b16 %v973
    %v1264 = vunpack.c.l.b16 %v974
    %v1265 = vunpack.c.h.b16 %v974
    %v1266 = vunpack.c.l.b16 %v975
    %v1267 = vunpack.c.h.b16 %v975
    %v1268 = vunpack.c.l.b16 %v976
    %v1269 = vunpack.c.h.b16 %v976
    %v1270 = vunpack.c.l.b16 %v977
    %v1271 = vunpack.c.h.b16 %v977
    %v1272 = vunpack.c.l.b16 %v978
    %v1273 = vunpack.c.h.b16 %v978
    %v1274 = vunpack.c.l.b16 %v979
    %v1275 = vunpack.c.h.b16 %v979
    %v1276 = vunpack.c.l.b16 %v980
    %v1277 = vunpack.c.h.b16 %v980
    %v1278 = vunpack.c.l.b16 %v981
    %v1279 = vunpack.c.h.b16 %v981
    %v1280 = vunpack.c.l.b16 %v982
    %v1281 = vunpack.c.h.b16 %v982
    %v1282 = vunpack.c.l.b16 %v983
    %v1283 = vunpack.c.h.b16 %v983
    %v1284 = vunpack.c.l.b16 %v984
    %v1285 = vunpack.c.h.b16 %v984
    %v1286 = vunpack.c.l.b16 %v985
    %v1287 = vunpack.c.h.b16 %v985
    %v1288 = vunpack.c.l.b16 %v986
    %v1289 = vunpack.c.h.b16 %v986
    %v1290 = vunpack.c.l.b16 %v987
    %v1291 = vunpack.c.h.b16 %v987
    %v1292 = vunpack.c.l.b16 %v988
    %v1293 = vunpack.c.h.b16 %v988
    %v1294 = vunpack.c.l.b16 %v989
    %v1295 = vunpack.c.h.b16 %v989
    %v1296 = vunpack.c.l.b16 %v990
    %v1297 = vunpack.c.h.b16 %v990
    %v1298 = vunpack.c.l.b16 %v991
    %v1299 = vunpack.c.h.b16 %v991
    %v1300 = vunpack.c.l.b16 %v992
    %v1301 = vunpack.c.h.b16 %v992
    %v1302 = vunpack.c.l.b16 %v993
    %v1303 = vunpack.c.h.b16 %v993
    %v1304 = vunpack.c.l.b16 %v994
    %v1305 = vunpack.c.h.b16 %v994
    %v1306 = vunpack.c.l.b16 %v995
    %v1307 = vunpack.c.h.b16 %v995
    %v1308 = vunpack.c.l.b16 %v996
    %v1309 = vunpack.c.h.b16 %v996
    %v1310 = vunpack.c.l.b16 %v997
    %v1311 = vunpack.c.h.b16 %v997
    %v1312 = vunpack.c.l.b16 %v998
    %v1313 = vunpack.c.h.b16 %v998
    %v1314 = vunpack.c.l.b16 %v999
    %v1315 = vunpack.c.h.b16 %v999
    %v1316 = vunpack.c.l.b16 %v1000
    %v1317 = vunpack.c.h.b16 %v1000
    %v1318 = vunpack.c.l.b16 %v1001
    %v1319 = vunpack.c.h.b16 %v1001
    %v1320 = vunpack.c.l.b16 %v1002
    %v1321 = vunpack.c.h.b16 %v1002
    %v1322 = vunpack.c.l.b16 %v1003
    %v1323 = vunpack.c.h.b16 %v1003
    %v1324 = vunpack.c.l.b16 %v1004
    %v1325 = vunpack.c.h.b16 %v1004
    %v1326 = vunpack.c.l.b16 %v1005
    %v1327 = vunpack.c.h.b16 %v1005
    %v1328 = vunpack.c.l.b16 %v1006
    %v1329 = vunpack.c.h.b16 %v1006
    %v1330 = vunpack.c.l.b16 %v1007
    %v1331 = vunpack.c.h.b16 %v1007
    %v1332 = vunpack.c.l.b16 %v1008
    %v1333 = vunpack.c.h.b16 %v1008
    %v1334 = vunpack.c.l.b16 %v1009
    %v1335 = vunpack.c.h.b16 %v1009
    %v1336 = vunpack.c.l.b16 %v1010
    %v1337 = vunpack.c.h.b16 %v1010
    %v1338 = vunpack.c.l.b16 %v1011
    %v1339 = vunpack.c.h.b16 %v1011
    %v1340 = vunpack.c.l.b16 %v1012
    %v1341 = vunpack.c.h.b16 %v1012
    %v1342 = vunpack.c.l.b16 %v1013
    %v1343 = vunpack.c.h.b16 %v1013
    %v1344 = vunpack.c.l.b16 %v1014
    %v1345 = vunpack.c.h.b16 %v1014
    %v1346 = vunpack.c.l.b16 %v1015
    %v1347 = vunpack.c.h.b16 %v1015
    %v1348 = vunpack.c.l.b16 %v1016
    %v1349 = vunpack.c.h.b16 %v1016
    %v1350 = vunpack.c.l.b16 %v1017
    %v1351 = vunpack.c.h.b16 %v1017
    %v1352 = vunpack.c.l.b16 %v1018
    %v1353 = vunpack.c.h.b16 %v1018
    %v1354 = vunpack.c.l.b16 %v1019
    %v1355 = vunpack.c.h.b16 %v1019
    %v1356 = vunpack.c.l.b16 %v1020
    %v1357 = vunpack.c.h.b16 %v1020
    %v1358 = vunpack.c.l.b16 %v1021
    %v1359 = vunpack.c.h.b16 %v1021
    %v1360 = vunpack.c.l.b16 %v1022
    %v1361 = vunpack.c.h.b16 %v1022
    %v1362 = vunpack.c.l.b16 %v1023
    %v1363 = vunpack.c.h.b16 %v1023
    %v1364 = vunpack.c.l.b16 %v1024
    %v1365 = vunpack.c.h.b16 %v1024
    %v1366 = vunpack.c.l.b16 %v1025
    %v1367 = vunpack.c.h.b16 %v1025
    %v1368 = vunpack.c.l.b16 %v1026
    %v1369 = vunpack.c.h.b16 %v1026
    %v1370 = vunpack.c.l.b16 %v1027
    %v1371 = vunpack.c.h.b16 %v1027
    %v1372 = vunpack.c.l.b16 %v1028
    %v1373 = vunpack.c.h.b16 %v1028
    %v1374 = vunpack.c.l.b16 %v1029
    %v1375 = vunpack.c.h.b16 %v1029
    %v1376 = vunpack.c.l.b16 %v1030
    %v1377 = vunpack.c.h.b16 %v1030
    %v1378 = vunpack.c.l.b16 %v1031
    %v1379 = vunpack.c.h.b16 %v1031
    %v1380 = vunpack.c.l.b16 %v1032
    %v1381 = vunpack.c.h.b16 %v1032
    %v1382 = vunpack.c.l.b16 %v1033
    %v1383 = vunpack.c.h.b16 %v1033
    %v1384 = vunpack.c.l.b16 %v1034
    %v1385 = vunpack.c.h.b16 %v1034
    %v1386 = vunpack.c.l.b16 %v1035
    %v1387 = vunpack.c.h.b16 %v1035
    %v1388 = vunpack.c.l.b16 %v1036
    %v1389 = vunpack.c.h.b16 %v1036
    %v1390 = vunpack.c.l.b16 %v1037
    %v1391 = vunpack.c.h.b16 %v1037
    %v1392 = vunpack.c.l.b16 %v1038
    %v1393 = vunpack.c.h.b16 %v1038
    %v1394 = vunpack.c.l.b16 %v1039
    %v1395 = vunpack.c.h.b16 %v1039
    %v1396 = vunpack.c.l.b16 %v1040
    %v1397 = vunpack.c.h.b16 %v1040
    %v1398 = vunpack.c.l.b16 %v1041
    %v1399 = vunpack.c.h.b16 %v1041
    %v1400 = vunpack.c.l.b16 %v1042
    %v1401 = vunpack.c.h.b16 %v1042
    %v1402 = vunpack.c.l.b16 %v1043
    %v1403 = vunpack.c.h.b16 %v1043
    %v1404 = vunpack.c.l.b16 %v1044
    %v1405 = vunpack.c.h.b16 %v1044
    %v1406 = vunpack.c.l.b16 %v1045
    %v1407 = vunpack.c.h.b16 %v1045
    %v1408 = vunpack.c.l.b16 %v1046
    %v1409 = vunpack.c.h.b16 %v1046
    %v1410 = vunpack.c.l.b16 %v1047
    %v1411 = vunpack.c.h.b16 %v1047
    %v1412 = vunpack.c.l.b16 %v1048
    %v1413 = vunpack.c.h.b16 %v1048
    %v1414 = vunpack.c.l.b16 %v1049
    %v1415 = vunpack.c.h.b16 %v1049
    %v1416 = vunpack.c.l.b16 %v1050
    %v1417 = vunpack.c.h.b16 %v1050
    %v1418 = vunpack.c.l.b16 %v1051
    %v1419 = vunpack.c.h.b16 %v1051
    %v1420 = vunpack.c.l.b16 %v1052
    %v1421 = vunpack.c.h.b16 %v1052
    %v1422 = vunpack.c.l.b16 %v1053
    %v1423 = vunpack.c.h.b16 %v1053
    %v1424 = vunpack.c.l.b16 %v1054
    %v1425 = vunpack.c.h.b16 %v1054
    %v1426 = vunpack.c.l.b16 %v1055
    %v1427 = vunpack.c.h.b16 %v1055
    %v1428 = vunpack.c.l.b16 %v1056
    %v1429 = vunpack.c.h.b16 %v1056
    %v1430 = vunpack.c.l.b16 %v1057
    %v1431 = vunpack.c.h.b16 %v1057
    %v1432 = vunpack.c.l.b16 %v1058
    %v1433 = vunpack.c.h.b16 %v1058
    %v1434 = vunpack.c.l.b16 %v1059
    %v1435 = vunpack.c.h.b16 %v1059
    %v1436 = vunpack.c.l.b16 %v1060
    %v1437 = vunpack.c.h.b16 %v1060
    %v1438 = vunpack.c.l.b16 %v1061
    %v1439 = vunpack.c.h.b16 %v1061
    %v1440 = vunpack.c.l.b16 %v1062
    %v1441 = vunpack.c.h.b16 %v1062
    %v1442 = vunpack.c.l.b16 %v1063
    %v1443 = vunpack.c.h.b16 %v1063
    %v1444 = vunpack.c.l.b16 %v1064
    %v1445 = vunpack.c.h.b16 %v1064
    %v1446 = vunpack.c.l.b16 %v1065
    %v1447 = vunpack.c.h.b16 %v1065
    %v1448 = vunpack.c.l.b16 %v1066
    %v1449 = vunpack.c.h.b16 %v1066
    %v1450 = vunpack.c.l.b16 %v1067
    %v1451 = vunpack.c.h.b16 %v1067
    %v1452 = vunpack.c.l.b16 %v1068
    %v1453 = vunpack.c.h.b16 %v1068
    %v1454 = vunpack.c.l.b16 %v1069
    %v1455 = vunpack.c.h.b16 %v1069
    %v1456 = vunpack.c.l.b16 %v1070
    %v1457 = vunpack.c.h.b16 %v1070
    %v1458 = vunpack.c.l.b16 %v1071
    %v1459 = vunpack.c.h.b16 %v1071
    %v1460 = vunpack.c.l.b16 %v1072
    %v1461 = vunpack.c.h.b16 %v1072
    %v1462 = vunpack.c.l.b16 %v1073
    %v1463 = vunpack.c.h.b16 %v1073
    %v1464 = vunpack.c.l.b16 %v1074
    %v1465 = vunpack.c.h.b16 %v1074
    %v1466 = vunpack.c.l.b16 %v1075
    %v1467 = vunpack.c.h.b16 %v1075
    %v1468 = vunpack.c.l.b16 %v1076
    %v1469 = vunpack.c.h.b16 %v1076
    %v1470 = vunpack.c.l.b16 %v1077
    %v1471 = vunpack.c.h.b16 %v1077
    %v1472 = vunpack.c.l.b16 %v1078
    %v1473 = vunpack.c.h.b16 %v1078
    %v1474 = vunpack.c.l.b16 %v1079
    %v1475 = vunpack.c.h.b16 %v1079
    %v1476 = vpack.c.b16 %v1222, %v1220
    %v1477 = vpack.c.b16 %v1223, %v1221
    %v1478 = vpack.c.b16 %v1226, %v1224
    %v1479 = vpack.c.b16 %v1227, %v1225
    %v1480 = vpack.c.b16 %v1230, %v1228
    %v1481 = vpack.c.b16 %v1231, %v1229
    %v1482 = vpack.c.b16 %v1234, %v1232
    %v1483 = vpack.c.b16 %v1235, %v1233
    %v1484 = vpack.c.b16 %v1238, %v1236
    %v1485 = vpack.c.b16 %v1239, %v1237
    %v1486 = vpack.c.b16 %v1242, %v1240
    %v1487 = vpack.c.b16 %v1243, %v1241
    %v1488 = vpack.c.b16 %v1246, %v1244
    %v1489 = vpack.c.b16 %v1247, %v1245
    %v1490 = vpack.c.b16 %v1250, %v1248
    %v1491 = vpack.c.b16 %v1251, %v1249
    %v1492 = vpack.c.b16 %v1254, %v1252
    %v1493 = vpack.c.b16 %v1255, %v1253
    %v1494 = vpack.c.b16 %v1258, %v1256
    %v1495 = vpack.c.b16 %v1259, %v1257
    %v1496 = vpack.c.b16 %v1262, %v1260
    %v1497 = vpack.c.b16 %v1263, %v1261
    %v1498 = vpack.c.b16 %v1266, %v1264
    %v1499 = vpack.c.b16 %v1267, %v1265
    %v1500 = vpack.c.b16 %v1270, %v1268
    %v1501 = vpack.c.b16 %v1271, %v1269
    %v1502 = vpack.c.b16 %v1274, %v1272
    %v1503 = vpack.c.b16 %v1275, %v1273
    %v1504 = vpack.c.b16 %v1278, %v1276
    %v1505 = vpack.c.b16 %v1279, %v1277
    %v1506 = vpack.c.b16 %v1282, %v1280
    %v1507 = vpack.c.b16 %v1283, %v1281
    %v1508 = vpack.c.b16 %v1286, %v1284
    %v1509 = vpack.c.b16 %v1287, %v1285
    %v1510 = vpack.c.b16 %v1290, %v1288
    %v1511 = vpack.c.b16 %v1291, %v1289
    %v1512 = vpack.c.b16 %v1294, %v1292
    %v1513 = vpack.c.b16 %v1295, %v1293
    %v1514 = vpack.c.b16 %v1298, %v1296
    %v1515 = vpack.c.b16 %v1299, %v1297
    %v1516 = vpack.c.b16 %v1302, %v1300
    %v1517 = vpack.c.b16 %v1303, %v1301
    %v1518 = vpack.c.b16 %v1306, %v1304
    %v1519 = vpack.c.b16 %v1307, %v1305
    %v1520 = vpack.c.b16 %v1310, %v1308
    %v1521 = vpack.c.b16 %v1311, %v1309
    %v1522 = vpack.c.b16 %v1314, %v1312
    %v1523 = vpack.c.b16 %v1315, %v1313
    %v1524 = vpack.c.b16 %v1318, %v1316
    %v1525 = vpack.c.b16 %v1319, %v1317
    %v1526 = vpack.c.b16 %v1322, %v1320
    %v1527 = vpack.c.b16 %v1323, %v1321
    %v1528 = vpack.c.b16 %v1326, %v1324
    %v1529 = vpack.c.b16 %v1327, %v1325
    %v1530 = vpack.c.b16 %v1330, %v1328
    %v1531 = vpack.c.b16 %v1331, %v1329
    %v1532 = vpack.c.b16 %v1334, %v1332
    %v1533 = vpack.c.b16 %v1335, %v1333
    %v1534 = vpack.c.b16 %v1338, %v1336
    %v1535 = vpack.c.b16 %v1339, %v1337
    %v1536 = vpack.c.b16 %v1342, %v1340
    %v1537 = vpack.c.b16 %v1343, %v1341
    %v1538 = vpack.c.b16 %v1346, %v1344
    %v1539 = vpack.c.b16 %v1347, %v1345
    %v1540 = vpack.c.b16 %v1350, %v1348
    %v1541 = vpack.c.b16 %v1351, %v1349
    %v1542 = vpack.c.b16 %v1354, %v1352
    %v1543 = vpack.c.b16 %v1355, %v1353
    %v1544 = vpack.c.b16 %v1358, %v1356
    %v1545 = vpack.c.b16 %v1359, %v1357
    %v1546 = vpack.c.b16 %v1362, %v1360
    %v1547 = vpack.c.b16 %v1363, %v1361
    %v1548 = vpack.c.b16 %v1366, %v1364
    %v1549 = vpack.c.b16 %v1367, %v1365
    %v1550 = vpack.c.b16 %v1370, %v1368
    %v1551 = vpack.c.b16 %v1371, %v1369
    %v1552 = vpack.c.b16 %v1374, %v1372
    %v1553 = vpack.c.b16 %v1375, %v1373
    %v1554 = vpack.c.b16 %v1378, %v1376
    %v1555 = vpack.c.b16 %v1379, %v1377
    %v1556 = vpack.c.b16 %v1382, %v1380
    %v1557 = vpack.c.b16 %v1383, %v1381
    %v1558 = vpack.c.b16 %v1386, %v1384
    %v1559 = vpack.c.b16 %v1387, %v1385
    %v1560 = vpack.c.b16 %v1390, %v1388
    %v1561 = vpack.c.b16 %v1391, %v1389
    %v1562 = vpack.c.b16 %v1394, %v1392
    %v1563 = vpack.c.b16 %v1395, %v1393
    %v1564 = vpack.c.b16 %v1398, %v1396
    %v1565 = vpack.c.b16 %v1399, %v1397
    %v1566 = vpack.c.b16 %v1402, %v1400
    %v1567 = vpack.c.b16 %v1403, %v1401
    %v1568 = vpack.c.b16 %v1406, %v1404
    %v1569 = vpack.c.b16 %v1407, %v1405
    %v1570 = vpack.c.b16 %v1410, %v1408
    %v1571 = vpack.c.b16 %v1411, %v1409
    %v1572 = vpack.c.b16 %v1414, %v1412
    %v1573 = vpack.c.b16 %v1415, %v1413
    %v1574 = vpack.c.b16 %v1418, %v1416
    %v1575 = vpack.c.b16 %v1419, %v1417
    %v1576 = vpack.c.b16 %v1422, %v1420
    %v1577 = vpack.c.b16 %v1423, %v1421
    %v1578 = vpack.c.b16 %v1426, %v1424
    %v1579 = vpack.c.b16 %v1427, %v1425
    %v1580 = vpack.c.b16 %v1430, %v1428
    %v1581 = vpack.c.b16 %v1431, %v1429
    %v1582 = vpack.c.b16 %v1434, %v1432
    %v1583 = vpack.c.b16 %v1435, %v1433
    %v1584 = vpack.c.b16 %v1438, %v1436
    %v1585 = vpack.c.b16 %v1439, %v1437
    %v1586 = vpack.c.b16 %v1442, %v1440
    %v1587 = vpack.c.b16 %v1443, %v1441
    %v1588 = vpack.c.b16 %v1446, %v1444
    %v1589 = vpack.c.b16 %v1447, %v1445
    %v1590 = vpack.c.b16 %v1450, %v1448
    %v1591 = vpack.c.b16 %v1451, %v1449
    %v1592 = vpack.c.b16 %v1454, %v1452
    %v1593 = vpack.c.b16 %v1455, %v1453
    %v1594 = vpack.c.b16 %v1458, %v1456
    %v1595 = vpack.c.b16 %v1459, %v1457
    %v1596 = vpack.c.b16 %v1462, %v1460
    %v1597 = vpack.c.b16 %v1463, %v1461
    %v1598 = vpack.c.b16 %v1466, %v1464
    %v1599 = vpack.c.b16 %v1467, %v1465
    %v1600 = vpack.c.b16 %v1470, %v1468
    %v1601 = vpack.c.b16 %v1471, %v1469
    %v1602 = vpack.c.b16 %v1474, %v1472
    %v1603 = vpack.c.b16 %v1475, %v1473
    %1732 = vmatprep.subr.bf16.mxu0 %v1477
    %1733 = vmatpush1.bf16.msra.mxu0 %v1476
    %1734 = vmatprep.subr.bf16.mxu0 %v1479
    %1735 = vmatpush1.bf16.msra.mxu0 %v1478
    %1736 = vmatprep.subr.bf16.mxu0 %v1481
    %1737 = vmatpush1.bf16.msra.mxu0 %v1480
    %1738 = vmatprep.subr.bf16.mxu0 %v1483
    %1739 = vmatpush1.bf16.msra.mxu0 %v1482
    %1740 = vmatprep.subr.bf16.mxu0 %v1485
    %1741 = vmatpush1.bf16.msra.mxu0 %v1484
    %1742 = vmatprep.subr.bf16.mxu0 %v1487
    %1743 = vmatpush1.bf16.msra.mxu0 %v1486
    %1744 = vmatprep.subr.bf16.mxu0 %v1489
    %1745 = vmatpush1.bf16.msra.mxu0 %v1488
    %1746 = vmatprep.subr.bf16.mxu0 %v1491
    %1747 = vmatpush1.bf16.msra.mxu0 %v1490
    %1748 = vmatprep.subr.bf16.mxu0 %v1493
    %1749 = vmatpush1.bf16.msra.mxu0 %v1492
    %1750 = vmatprep.subr.bf16.mxu0 %v1495
    %1751 = vmatpush1.bf16.msra.mxu0 %v1494
    %1752 = vmatprep.subr.bf16.mxu0 %v1497
    %1753 = vmatpush1.bf16.msra.mxu0 %v1496
    %1754 = vmatprep.subr.bf16.mxu0 %v1499
    %1755 = vmatpush1.bf16.msra.mxu0 %v1498
    %1756 = vmatprep.subr.bf16.mxu0 %v1501
    %1757 = vmatpush1.bf16.msra.mxu0 %v1500
    %1758 = vmatprep.subr.bf16.mxu0 %v1503
    %1759 = vmatpush1.bf16.msra.mxu0 %v1502
    %1760 = vmatprep.subr.bf16.mxu0 %v1505
    %1761 = vmatpush1.bf16.msra.mxu0 %v1504
    %1762 = vmatprep.subr.bf16.mxu0 %v1507
    %1763 = vmatpush1.bf16.msra.mxu0 %v1506
    %1764 = vmatprep.mubr.bf16.mxu0 %v889
    %1765 = vmatmul.mubr.bf16.gmra.mrb[0].mxu0 %v888
    %v1766 = vpop.f32.mrb[0].mxu0
    %v1767 = vadd.f32 %v1085, %v1766
    %v1768 = vpop.f32.mrb[0].mxu0
    %v1769 = vadd.f32 %v1089, %v1768
    %v1770 = vpop.f32.mrb[0].mxu0
    %v1771 = vadd.f32 %v1085, %v1770
    %v1772 = vpop.f32.mrb[0].mxu0
    %v1773 = vadd.f32 %v1089, %v1772
    %1774 = vmatprep.mubr.bf16.mxu0 %v897
    %1775 = vmatmul.mubr.bf16.gmra.mrb[0].mxu0 %v896
    %v1776 = vpop.f32.mrb[0].mxu0
    %v1777 = vadd.f32 %v1085, %v1776
    %v1778 = vpop.f32.mrb[0].mxu0
    %v1779 = vadd.f32 %v1089, %v1778
    %v1780 = vpop.f32.mrb[0].mxu0
    %v1781 = vadd.f32 %v1085, %v1780
    %v1782 = vpop.f32.mrb[0].mxu0
    %v1783 = vadd.f32 %v1089, %v1782
    %1784 = vmatprep.mubr.bf16.mxu0 %v905
    %1785 = vmatmul.mubr.bf16.gmra.mrb[0].mxu0 %v904
    %v1786 = vpop.f32.mrb[0].mxu0
    %v1787 = vadd.f32 %v1085, %v1786
    %v1788 = vpop.f32.mrb[0].mxu0
    %v1789 = vadd.f32 %v1089, %v1788
    %v1790 = vpop.f32.mrb[0].mxu0
    %v1791 = vadd.f32 %v1085, %v1790
    %v1792 = vpop.f32.mrb[0].mxu0
    %v1793 = vadd.f32 %v1089, %v1792
    %1794 = vmatprep.mubr.bf16.mxu0 %v913
    %1795 = vmatmul.mubr.bf16.gmra.mrb[0].mxu0 %v912
    %v1796 = vpop.f32.mrb[0].mxu0
    %v1797 = vadd.f32 %v1085, %v1796
    %v1798 = vpop.f32.mrb[0].mxu0
    %v1799 = vadd.f32 %v1089, %v1798
    %v1800 = vpop.f32.mrb[0].mxu0
    %v1801 = vadd.f32 %v1085, %v1800
    %v1802 = vpop.f32.mrb[0].mxu0
    %v1803 = vadd.f32 %v1089, %v1802
    %1804 = vmatprep.mubr.bf16.mxu0 %v921
    %1805 = vmatmul.mubr.bf16.gmra.mrb[0].mxu0 %v920
    %v1806 = vpop.f32.mrb[0].mxu0
    %v1807 = vadd.f32 %v1085, %v1806
    %v1808 = vpop.f32.mrb[0].mxu0
    %v1809 = vadd.f32 %v1089, %v1808
    %v1810 = vpop.f32.mrb[0].mxu0
    %v1811 = vadd.f32 %v1085, %v1810
    %v1812 = vpop.f32.mrb[0].mxu0
    %v1813 = vadd.f32 %v1089, %v1812
    %1814 = vmatprep.mubr.bf16.mxu0 %v929
    %1815 = vmatmul.mubr.bf16.gmra.mrb[0].mxu0 %v928
    %v1816 = vpop.f32.mrb[0].mxu0
    %v1817 = vadd.f32 %v1085, %v1816
    %v1818 = vpop.f32.mrb[0].mxu0
    %v1819 = vadd.f32 %v1089, %v1818
    %v1820 = vpop.f32.mrb[0].mxu0
    %v1821 = vadd.f32 %v1085, %v1820
    %v1822 = vpop.f32.mrb[0].mxu0
    %v1823 = vadd.f32 %v1089, %v1822
    %1824 = vmatprep.mubr.bf16.mxu0 %v937
    %1825 = vmatmul.mubr.bf16.gmra.mrb[0].mxu0 %v936
    %v1826 = vpop.f32.mrb[0].mxu0
    %v1827 = vadd.f32 %v1085, %v1826
    %v1828 = vpop.f32.mrb[0].mxu0
    %v1829 = vadd.f32 %v1089, %v1828
    %v1830 = vpop.f32.mrb[0].mxu0
    %v1831 = vadd.f32 %v1085, %v1830
    %v1832 = vpop.f32.mrb[0].mxu0
    %v1833 = vadd.f32 %v1089, %v1832
    %1834 = vmatprep.mubr.bf16.mxu0 %v945
    %1835 = vmatmul.mubr.bf16.gmra.mrb[0].mxu0 %v944
    %v1836 = vpop.f32.mrb[0].mxu0
    %v1837 = vadd.f32 %v1085, %v1836
    %v1838 = vpop.f32.mrb[0].mxu0
    %v1839 = vadd.f32 %v1089, %v1838
    %v1840 = vpop.f32.mrb[0].mxu0
    %v1841 = vadd.f32 %v1085, %v1840
    %v1842 = vpop.f32.mrb[0].mxu0
    %v1843 = vadd.f32 %v1089, %v1842
    %1844 = vdwg.mxu0
    %1845 = vmatprep.subr.bf16.mxu0 %v1509
    %1846 = vmatpush1.bf16.msra.mxu0 %v1508
    %1847 = vmatprep.subr.bf16.mxu0 %v1511
    %1848 = vmatpush1.bf16.msra.mxu0 %v1510
    %1849 = vmatprep.subr.bf16.mxu0 %v1513
    %1850 = vmatpush1.bf16.msra.mxu0 %v1512
    %1851 = vmatprep.subr.bf16.mxu0 %v1515
    %1852 = vmatpush1.bf16.msra.mxu0 %v1514
    %1853 = vmatprep.subr.bf16.mxu0 %v1517
    %1854 = vmatpush1.bf16.msra.mxu0 %v1516
    %1855 = vmatprep.subr.bf16.mxu0 %v1519
    %1856 = vmatpush1.bf16.msra.mxu0 %v1518
    %1857 = vmatprep.subr.bf16.mxu0 %v1521
    %1858 = vmatpush1.bf16.msra.mxu0 %v1520
    %1859 = vmatprep.subr.bf16.mxu0 %v1523
    %1860 = vmatpush1.bf16.msra.mxu0 %v1522
    %1861 = vmatprep.subr.bf16.mxu0 %v1525
    %1862 = vmatpush1.bf16.msra.mxu0 %v1524
    %1863 = vmatprep.subr.bf16.mxu0 %v1527
    %1864 = vmatpush1.bf16.msra.mxu0 %v1526
    %1865 = vmatprep.subr.bf16.mxu0 %v1529
    %1866 = vmatpush1.bf16.msra.mxu0 %v1528
    %1867 = vmatprep.subr.bf16.mxu0 %v1531
    %1868 = vmatpush1.bf16.msra.mxu0 %v1530
    %1869 = vmatprep.subr.bf16.mxu0 %v1533
    %1870 = vmatpush1.bf16.msra.mxu0 %v1532
    %1871 = vmatprep.subr.bf16.mxu0 %v1535
    %1872 = vmatpush1.bf16.msra.mxu0 %v1534
    %1873 = vmatprep.subr.bf16.mxu0 %v1537
    %1874 = vmatpush1.bf16.msra.mxu0 %v1536
    %1875 = vmatprep.subr.bf16.mxu0 %v1539
    %1876 = vmatpush1.bf16.msra.mxu0 %v1538
    %1877 = vmatprep.mubr.bf16.mxu0 %v891
    %1878 = vmatmul.mubr.bf16.gmra.mrb[0].mxu0 %v890
    %v1879 = vpop.f32.mrb[0].mxu0
    %v1880 = vadd.f32 %v1767, %v1879
    %v1881 = vpop.f32.mrb[0].mxu0
    %v1882 = vadd.f32 %v1769, %v1881
    %v1883 = vpop.f32.mrb[0].mxu0
    %v1884 = vadd.f32 %v1771, %v1883
    %v1885 = vpop.f32.mrb[0].mxu0
    %v1886 = vadd.f32 %v1773, %v1885
    %1887 = vmatprep.mubr.bf16.mxu0 %v899
    %1888 = vmatmul.mubr.bf16.gmra.mrb[0].mxu0 %v898
    %v1889 = vpop.f32.mrb[0].mxu0
    %v1890 = vadd.f32 %v1777, %v1889
    %v1891 = vpop.f32.mrb[0].mxu0
    %v1892 = vadd.f32 %v1779, %v1891
    %v1893 = vpop.f32.mrb[0].mxu0
    %v1894 = vadd.f32 %v1781, %v1893
    %v1895 = vpop.f32.mrb[0].mxu0
    %v1896 = vadd.f32 %v1783, %v1895
    %1897 = vmatprep.mubr.bf16.mxu0 %v907
    %1898 = vmatmul.mubr.bf16.gmra.mrb[0].mxu0 %v906
    %v1899 = vpop.f32.mrb[0].mxu0
    %v1900 = vadd.f32 %v1787, %v1899
    %v1901 = vpop.f32.mrb[0].mxu0
    %v1902 = vadd.f32 %v1789, %v1901
    %v1903 = vpop.f32.mrb[0].mxu0
    %v1904 = vadd.f32 %v1791, %v1903
    %v1905 = vpop.f32.mrb[0].mxu0
    %v1906 = vadd.f32 %v1793, %v1905
    %1907 = vmatprep.mubr.bf16.mxu0 %v915
    %1908 = vmatmul.mubr.bf16.gmra.mrb[0].mxu0 %v914
    %v1909 = vpop.f32.mrb[0].mxu0
    %v1910 = vadd.f32 %v1797, %v1909
    %v1911 = vpop.f32.mrb[0].mxu0
    %v1912 = vadd.f32 %v1799, %v1911
    %v1913 = vpop.f32.mrb[0].mxu0
    %v1914 = vadd.f32 %v1801, %v1913
    %v1915 = vpop.f32.mrb[0].mxu0
    %v1916 = vadd.f32 %v1803, %v1915
    %1917 = vmatprep.mubr.bf16.mxu0 %v923
    %1918 = vmatmul.mubr.bf16.gmra.mrb[0].mxu0 %v922
    %v1919 = vpop.f32.mrb[0].mxu0
    %v1920 = vadd.f32 %v1807, %v1919
    %v1921 = vpop.f32.mrb[0].mxu0
    %v1922 = vadd.f32 %v1809, %v1921
    %v1923 = vpop.f32.mrb[0].mxu0
    %v1924 = vadd.f32 %v1811, %v1923
    %v1925 = vpop.f32.mrb[0].mxu0
    %v1926 = vadd.f32 %v1813, %v1925
    %1927 = vmatprep.mubr.bf16.mxu0 %v931
    %1928 = vmatmul.mubr.bf16.gmra.mrb[0].mxu0 %v930
    %v1929 = vpop.f32.mrb[0].mxu0
    %v1930 = vadd.f32 %v1817, %v1929
    %v1931 = vpop.f32.mrb[0].mxu0
    %v1932 = vadd.f32 %v1819, %v1931
    %v1933 = vpop.f32.mrb[0].mxu0
    %v1934 = vadd.f32 %v1821, %v1933
    %v1935 = vpop.f32.mrb[0].mxu0
    %v1936 = vadd.f32 %v1823, %v1935
    %1937 = vmatprep.mubr.bf16.mxu0 %v939
    %1938 = vmatmul.mubr.bf16.gmra.mrb[0].mxu0 %v938
    %v1939 = vpop.f32.mrb[0].mxu0
    %v1940 = vadd.f32 %v1827, %v1939
    %v1941 = vpop.f32.mrb[0].mxu0
    %v1942 = vadd.f32 %v1829, %v1941
    %v1943 = vpop.f32.mrb[0].mxu0
    %v1944 = vadd.f32 %v1831, %v1943
    %v1945 = vpop.f32.mrb[0].mxu0
    %v1946 = vadd.f32 %v1833, %v1945
    %1947 = vmatprep.mubr.bf16.mxu0 %v947
    %1948 = vmatmul.mubr.bf16.gmra.mrb[0].mxu0 %v946
    %v1949 = vpop.f32.mrb[0].mxu0
    %v1950 = vadd.f32 %v1837, %v1949
    %v1951 = vpop.f32.mrb[0].mxu0
    %v1952 = vadd.f32 %v1839, %v1951
    %v1953 = vpop.f32.mrb[0].mxu0
    %v1954 = vadd.f32 %v1841, %v1953
    %v1955 = vpop.f32.mrb[0].mxu0
    %v1956 = vadd.f32 %v1843, %v1955
    %1957 = vdwg.mxu0
    %1958 = vmatprep.subr.bf16.mxu0 %v1541
    %1959 = vmatpush1.bf16.msra.mxu0 %v1540
    %1960 = vmatprep.subr.bf16.mxu0 %v1543
    %1961 = vmatpush1.bf16.msra.mxu0 %v1542
    %1962 = vmatprep.subr.bf16.mxu0 %v1545
    %1963 = vmatpush1.bf16.msra.mxu0 %v1544
    %1964 = vmatprep.subr.bf16.mxu0 %v1547
    %1965 = vmatpush1.bf16.msra.mxu0 %v1546
    %1966 = vmatprep.subr.bf16.mxu0 %v1549
    %1967 = vmatpush1.bf16.msra.mxu0 %v1548
    %1968 = vmatprep.subr.bf16.mxu0 %v1551
    %1969 = vmatpush1.bf16.msra.mxu0 %v1550
    %1970 = vmatprep.subr.bf16.mxu0 %v1553
    %1971 = vmatpush1.bf16.msra.mxu0 %v1552
    %1972 = vmatprep.subr.bf16.mxu0 %v1555
    %1973 = vmatpush1.bf16.msra.mxu0 %v1554
    %1974 = vmatprep.subr.bf16.mxu0 %v1557
    %1975 = vmatpush1.bf16.msra.mxu0 %v1556
    %1976 = vmatprep.subr.bf16.mxu0 %v1559
    %1977 = vmatpush1.bf16.msra.mxu0 %v1558
    %1978 = vmatprep.subr.bf16.mxu0 %v1561
    %1979 = vmatpush1.bf16.msra.mxu0 %v1560
    %1980 = vmatprep.subr.bf16.mxu0 %v1563
    %1981 = vmatpush1.bf16.msra.mxu0 %v1562
    %1982 = vmatprep.subr.bf16.mxu0 %v1565
    %1983 = vmatpush1.bf16.msra.mxu0 %v1564
    %1984 = vmatprep.subr.bf16.mxu0 %v1567
    %1985 = vmatpush1.bf16.msra.mxu0 %v1566
    %1986 = vmatprep.subr.bf16.mxu0 %v1569
    %1987 = vmatpush1.bf16.msra.mxu0 %v1568
    %1988 = vmatprep.subr.bf16.mxu0 %v1571
    %1989 = vmatpush1.bf16.msra.mxu0 %v1570
    %1990 = vmatprep.mubr.bf16.mxu0 %v893
    %1991 = vmatmul.mubr.bf16.gmra.mrb[0].mxu0 %v892
    %v1992 = vpop.f32.mrb[0].mxu0
    %v1993 = vadd.f32 %v1880, %v1992
    %v1994 = vpop.f32.mrb[0].mxu0
    %v1995 = vadd.f32 %v1882, %v1994
    %v1996 = vpop.f32.mrb[0].mxu0
    %v1997 = vadd.f32 %v1884, %v1996
    %v1998 = vpop.f32.mrb[0].mxu0
    %v1999 = vadd.f32 %v1886, %v1998
    %2000 = vmatprep.mubr.bf16.mxu0 %v901
    %2001 = vmatmul.mubr.bf16.gmra.mrb[0].mxu0 %v900
    %v2002 = vpop.f32.mrb[0].mxu0
    %v2003 = vadd.f32 %v1890, %v2002
    %v2004 = vpop.f32.mrb[0].mxu0
    %v2005 = vadd.f32 %v1892, %v2004
    %v2006 = vpop.f32.mrb[0].mxu0
    %v2007 = vadd.f32 %v1894, %v2006
    %v2008 = vpop.f32.mrb[0].mxu0
    %v2009 = vadd.f32 %v1896, %v2008
    %2010 = vmatprep.mubr.bf16.mxu0 %v909
    %2011 = vmatmul.mubr.bf16.gmra.mrb[0].mxu0 %v908
    %v2012 = vpop.f32.mrb[0].mxu0
    %v2013 = vadd.f32 %v1900, %v2012
    %v2014 = vpop.f32.mrb[0].mxu0
    %v2015 = vadd.f32 %v1902, %v2014
    %v2016 = vpop.f32.mrb[0].mxu0
    %v2017 = vadd.f32 %v1904, %v2016
    %v2018 = vpop.f32.mrb[0].mxu0
    %v2019 = vadd.f32 %v1906, %v2018
    %2020 = vmatprep.mubr.bf16.mxu0 %v917
    %2021 = vmatmul.mubr.bf16.gmra.mrb[0].mxu0 %v916
    %v2022 = vpop.f32.mrb[0].mxu0
    %v2023 = vadd.f32 %v1910, %v2022
    %v2024 = vpop.f32.mrb[0].mxu0
    %v2025 = vadd.f32 %v1912, %v2024
    %v2026 = vpop.f32.mrb[0].mxu0
    %v2027 = vadd.f32 %v1914, %v2026
    %v2028 = vpop.f32.mrb[0].mxu0
    %v2029 = vadd.f32 %v1916, %v2028
    %2030 = vmatprep.mubr.bf16.mxu0 %v925
    %2031 = vmatmul.mubr.bf16.gmra.mrb[0].mxu0 %v924
    %v2032 = vpop.f32.mrb[0].mxu0
    %v2033 = vadd.f32 %v1920, %v2032
    %v2034 = vpop.f32.mrb[0].mxu0
    %v2035 = vadd.f32 %v1922, %v2034
    %v2036 = vpop.f32.mrb[0].mxu0
    %v2037 = vadd.f32 %v1924, %v2036
    %v2038 = vpop.f32.mrb[0].mxu0
    %v2039 = vadd.f32 %v1926, %v2038
    %2040 = vmatprep.mubr.bf16.mxu0 %v933
    %2041 = vmatmul.mubr.bf16.gmra.mrb[0].mxu0 %v932
    %v2042 = vpop.f32.mrb[0].mxu0
    %v2043 = vadd.f32 %v1930, %v2042
    %v2044 = vpop.f32.mrb[0].mxu0
    %v2045 = vadd.f32 %v1932, %v2044
    %v2046 = vpop.f32.mrb[0].mxu0
    %v2047 = vadd.f32 %v1934, %v2046
    %v2048 = vpop.f32.mrb[0].mxu0
    %v2049 = vadd.f32 %v1936, %v2048
    %2050 = vmatprep.mubr.bf16.mxu0 %v941
    %2051 = vmatmul.mubr.bf16.gmra.mrb[0].mxu0 %v940
    %v2052 = vpop.f32.mrb[0].mxu0
    %v2053 = vadd.f32 %v1940, %v2052
    %v2054 = vpop.f32.mrb[0].mxu0
    %v2055 = vadd.f32 %v1942, %v2054
    %v2056 = vpop.f32.mrb[0].mxu0
    %v2057 = vadd.f32 %v1944, %v2056
    %v2058 = vpop.f32.mrb[0].mxu0
    %v2059 = vadd.f32 %v1946, %v2058
    %2060 = vmatprep.mubr.bf16.mxu0 %v949
    %2061 = vmatmul.mubr.bf16.gmra.mrb[0].mxu0 %v948
    %v2062 = vpop.f32.mrb[0].mxu0
    %v2063 = vadd.f32 %v1950, %v2062
    %v2064 = vpop.f32.mrb[0].mxu0
    %v2065 = vadd.f32 %v1952, %v2064
    %v2066 = vpop.f32.mrb[0].mxu0
    %v2067 = vadd.f32 %v1954, %v2066
    %v2068 = vpop.f32.mrb[0].mxu0
    %v2069 = vadd.f32 %v1956, %v2068
    %2070 = vdwg.mxu0
    %2071 = vmatprep.subr.bf16.mxu0 %v1573
    %2072 = vmatpush1.bf16.msra.mxu0 %v1572
    %2073 = vmatprep.subr.bf16.mxu0 %v1575
    %2074 = vmatpush1.bf16.msra.mxu0 %v1574
    %2075 = vmatprep.subr.bf16.mxu0 %v1577
    %2076 = vmatpush1.bf16.msra.mxu0 %v1576
    %2077 = vmatprep.subr.bf16.mxu0 %v1579
    %2078 = vmatpush1.bf16.msra.mxu0 %v1578
    %2079 = vmatprep.subr.bf16.mxu0 %v1581
    %2080 = vmatpush1.bf16.msra.mxu0 %v1580
    %2081 = vmatprep.subr.bf16.mxu0 %v1583
    %2082 = vmatpush1.bf16.msra.mxu0 %v1582
    %2083 = vmatprep.subr.bf16.mxu0 %v1585
    %2084 = vmatpush1.bf16.msra.mxu0 %v1584
    %2085 = vmatprep.subr.bf16.mxu0 %v1587
    %2086 = vmatpush1.bf16.msra.mxu0 %v1586
    %2087 = vmatprep.subr.bf16.mxu0 %v1589
    %2088 = vmatpush1.bf16.msra.mxu0 %v1588
    %2089 = vmatprep.subr.bf16.mxu0 %v1591
    %2090 = vmatpush1.bf16.msra.mxu0 %v1590
    %2091 = vmatprep.subr.bf16.mxu0 %v1593
    %2092 = vmatpush1.bf16.msra.mxu0 %v1592
    %2093 = vmatprep.subr.bf16.mxu0 %v1595
    %2094 = vmatpush1.bf16.msra.mxu0 %v1594
    %2095 = vmatprep.subr.bf16.mxu0 %v1597
    %2096 = vmatpush1.bf16.msra.mxu0 %v1596
    %2097 = vmatprep.subr.bf16.mxu0 %v1599
    %2098 = vmatpush1.bf16.msra.mxu0 %v1598
    %2099 = vmatprep.subr.bf16.mxu0 %v1601
    %2100 = vmatpush1.bf16.msra.mxu0 %v1600
    %2101 = vmatprep.subr.bf16.mxu0 %v1603
    %2102 = vmatpush1.bf16.msra.mxu0 %v1602
    %2103 = vmatprep.mubr.bf16.mxu0 %v895
    %2104 = vmatmul.mubr.bf16.gmra.mrb[0].mxu0 %v894
    %v2105 = vpop.f32.mrb[0].mxu0
    %v2106 = vadd.f32 %v1993, %v2105
    %v2107 = vpop.f32.mrb[0].mxu0
    %v2108 = vadd.f32 %v1995, %v2107
    %v2109 = vpop.f32.mrb[0].mxu0
    %v2110 = vadd.f32 %v1997, %v2109
    %v2111 = vpop.f32.mrb[0].mxu0
    %v2112 = vadd.f32 %v1999, %v2111
    %2113 = vmatprep.mubr.bf16.mxu0 %v903
    %2114 = vmatmul.mubr.bf16.gmra.mrb[0].mxu0 %v902
    %v2115 = vpop.f32.mrb[0].mxu0
    %v2116 = vadd.f32 %v2003, %v2115
    %v2117 = vpop.f32.mrb[0].mxu0
    %v2118 = vadd.f32 %v2005, %v2117
    %v2119 = vpop.f32.mrb[0].mxu0
    %v2120 = vadd.f32 %v2007, %v2119
    %v2121 = vpop.f32.mrb[0].mxu0
    %v2122 = vadd.f32 %v2009, %v2121
    %2123 = vmatprep.mubr.bf16.mxu0 %v911
    %2124 = vmatmul.mubr.bf16.gmra.mrb[0].mxu0 %v910
    %v2125 = vpop.f32.mrb[0].mxu0
    %v2126 = vadd.f32 %v2013, %v2125
    %v2127 = vpop.f32.mrb[0].mxu0
    %v2128 = vadd.f32 %v2015, %v2127
    %v2129 = vpop.f32.mrb[0].mxu0
    %v2130 = vadd.f32 %v2017, %v2129
    %v2131 = vpop.f32.mrb[0].mxu0
    %v2132 = vadd.f32 %v2019, %v2131
    %2133 = vmatprep.mubr.bf16.mxu0 %v919
    %2134 = vmatmul.mubr.bf16.gmra.mrb[0].mxu0 %v918
    %v2135 = vpop.f32.mrb[0].mxu0
    %v2136 = vadd.f32 %v2023, %v2135
    %v2137 = vpop.f32.mrb[0].mxu0
    %v2138 = vadd.f32 %v2025, %v2137
    %v2139 = vpop.f32.mrb[0].mxu0
    %v2140 = vadd.f32 %v2027, %v2139
    %v2141 = vpop.f32.mrb[0].mxu0
    %v2142 = vadd.f32 %v2029, %v2141
    %2143 = vmatprep.mubr.bf16.mxu0 %v927
    %2144 = vmatmul.mubr.bf16.gmra.mrb[0].mxu0 %v926
    %v2145 = vpop.f32.mrb[0].mxu0
    %v2146 = vadd.f32 %v2033, %v2145
    %v2147 = vpop.f32.mrb[0].mxu0
    %v2148 = vadd.f32 %v2035, %v2147
    %v2149 = vpop.f32.mrb[0].mxu0
    %v2150 = vadd.f32 %v2037, %v2149
    %v2151 = vpop.f32.mrb[0].mxu0
    %v2152 = vadd.f32 %v2039, %v2151
    %2153 = vmatprep.mubr.bf16.mxu0 %v935
    %2154 = vmatmul.mubr.bf16.gmra.mrb[0].mxu0 %v934
    %v2155 = vpop.f32.mrb[0].mxu0
    %v2156 = vadd.f32 %v2043, %v2155
    %v2157 = vpop.f32.mrb[0].mxu0
    %v2158 = vadd.f32 %v2045, %v2157
    %v2159 = vpop.f32.mrb[0].mxu0
    %v2160 = vadd.f32 %v2047, %v2159
    %v2161 = vpop.f32.mrb[0].mxu0
    %v2162 = vadd.f32 %v2049, %v2161
    %2163 = vmatprep.mubr.bf16.mxu0 %v943
    %2164 = vmatmul.mubr.bf16.gmra.mrb[0].mxu0 %v942
    %v2165 = vpop.f32.mrb[0].mxu0
    %v2166 = vadd.f32 %v2053, %v2165
    %v2167 = vpop.f32.mrb[0].mxu0
    %v2168 = vadd.f32 %v2055, %v2167
    %v2169 = vpop.f32.mrb[0].mxu0
    %v2170 = vadd.f32 %v2057, %v2169
    %v2171 = vpop.f32.mrb[0].mxu0
    %v2172 = vadd.f32 %v2059, %v2171
    %2173 = vmatprep.mubr.bf16.mxu0 %v951
    %2174 = vmatmul.mubr.bf16.gmra.mrb[0].mxu0 %v950
    %v2175 = vpop.f32.mrb[0].mxu0
    %v2176 = vadd.f32 %v2063, %v2175
    %v2177 = vpop.f32.mrb[0].mxu0
    %v2178 = vadd.f32 %v2065, %v2177
    %v2179 = vpop.f32.mrb[0].mxu0
    %v2180 = vadd.f32 %v2067, %v2179
    %v2181 = vpop.f32.mrb[0].mxu0
    %v2182 = vadd.f32 %v2069, %v2181
    %2183 = vdwg.mxu0
    %v2184 = vmax.f32 %v2106, 0.0
    %v2185 = vmax.f32 %v2108, 0.0
    %v2186 = vmax.f32 %v2110, 0.0
    %v2187 = vmax.f32 %v2112, 0.0
    %v2188 = vmax.f32 %v2116, 0.0
    %v2189 = vmax.f32 %v2118, 0.0
    %v2190 = vmax.f32 %v2120, 0.0
    %v2191 = vmax.f32 %v2122, 0.0
    %v2192 = vmax.f32 %v2126, 0.0
    %v2193 = vmax.f32 %v2128, 0.0
    %v2194 = vmax.f32 %v2130, 0.0
    %v2195 = vmax.f32 %v2132, 0.0
    %v2196 = vmax.f32 %v2136, 0.0
    %v2197 = vmax.f32 %v2138, 0.0
    %v2198 = vmax.f32 %v2140, 0.0
    %v2199 = vmax.f32 %v2142, 0.0
    %v2200 = vmax.f32 %v2146, 0.0
    %v2201 = vmax.f32 %v2148, 0.0
    %v2202 = vmax.f32 %v2150, 0.0
    %v2203 = vmax.f32 %v2152, 0.0
    %v2204 = vmax.f32 %v2156, 0.0
    %v2205 = vmax.f32 %v2158, 0.0
    %v2206 = vmax.f32 %v2160, 0.0
    %v2207 = vmax.f32 %v2162, 0.0
    %v2208 = vmax.f32 %v2166, 0.0
    %v2209 = vmax.f32 %v2168, 0.0
    %v2210 = vmax.f32 %v2170, 0.0
    %v2211 = vmax.f32 %v2172, 0.0
    %v2212 = vmax.f32 %v2176, 0.0
    %v2213 = vmax.f32 %v2178, 0.0
    %v2214 = vmax.f32 %v2180, 0.0
    %v2215 = vmax.f32 %v2182, 0.0
    %v2216 = vpack.c.bf16 %v2186, %v2184
    %v2217 = vpack.c.bf16 %v2187, %v2185
    %v2218 = vpack.c.bf16 %v2190, %v2188
    %v2219 = vpack.c.bf16 %v2191, %v2189
    %v2220 = vpack.c.bf16 %v2194, %v2192
    %v2221 = vpack.c.bf16 %v2195, %v2193
    %v2222 = vpack.c.bf16 %v2198, %v2196
    %v2223 = vpack.c.bf16 %v2199, %v2197
    %v2224 = vpack.c.bf16 %v2202, %v2200
    %v2225 = vpack.c.bf16 %v2203, %v2201
    %v2226 = vpack.c.bf16 %v2206, %v2204
    %v2227 = vpack.c.bf16 %v2207, %v2205
    %v2228 = vpack.c.bf16 %v2210, %v2208
    %v2229 = vpack.c.bf16 %v2211, %v2209
    %v2230 = vpack.c.bf16 %v2214, %v2212
    %v2231 = vpack.c.bf16 %v2215, %v2213
    %v2232 = vld [vmem:[#allocation7] sm:$0xff]
    %v2233 = vld [vmem:[#allocation7 + $0x8] sm:$0xff]
    %v2234 = vld [vmem:[#allocation7 + $0x10] sm:$0xff]
    %v2235 = vld [vmem:[#allocation7 + $0x18] sm:$0xff]
    %v2236 = vld [vmem:[#allocation7 + $0x20] sm:$0xff]
    %v2237 = vld [vmem:[#allocation7 + $0x28] sm:$0xff]
    %v2238 = vld [vmem:[#allocation7 + $0x30] sm:$0xff]
    %v2239 = vld [vmem:[#allocation7 + $0x38] sm:$0xff]
    %v2240 = vld [vmem:[#allocation7 + $0x40] sm:$0xff]
    %v2241 = vld [vmem:[#allocation7 + $0x48] sm:$0xff]
    %v2242 = vld [vmem:[#allocation7 + $0x50] sm:$0xff]
    %v2243 = vld [vmem:[#allocation7 + $0x58] sm:$0xff]
    %v2244 = vld [vmem:[#allocation7 + $0x60] sm:$0xff]
    %v2245 = vld [vmem:[#allocation7 + $0x68] sm:$0xff]
    %v2246 = vld [vmem:[#allocation7 + $0x70] sm:$0xff]
    %v2247 = vld [vmem:[#allocation7 + $0x78] sm:$0xff]
    %v2248 = vld [vmem:[#allocation7 + $0x80] sm:$0xff]
    %v2249 = vld [vmem:[#allocation7 + $0x88] sm:$0xff]
    %v2250 = vld [vmem:[#allocation7 + $0x90] sm:$0xff]
    %v2251 = vld [vmem:[#allocation7 + $0x98] sm:$0xff]
    %v2252 = vld [vmem:[#allocation7 + $0xa0] sm:$0xff]
    %v2253 = vld [vmem:[#allocation7 + $0xa8] sm:$0xff]
    %v2254 = vld [vmem:[#allocation7 + $0xb0] sm:$0xff]
    %v2255 = vld [vmem:[#allocation7 + $0xb8] sm:$0xff]
    %v2256 = vld [vmem:[#allocation7 + $0xc0] sm:$0xff]
    %v2257 = vld [vmem:[#allocation7 + $0xc8] sm:$0xff]
    %v2258 = vld [vmem:[#allocation7 + $0xd0] sm:$0xff]
    %v2259 = vld [vmem:[#allocation7 + $0xd8] sm:$0xff]
    %v2260 = vld [vmem:[#allocation7 + $0xe0] sm:$0xff]
    %v2261 = vld [vmem:[#allocation7 + $0xe8] sm:$0xff]
    %v2262 = vld [vmem:[#allocation7 + $0xf0] sm:$0xff]
    %v2263 = vld [vmem:[#allocation7 + $0xf8] sm:$0xff]
    %v2264 = vld [vmem:[%s6] sm:$0x3]
    %v2266 = vlaneseq
    %v2267 = vshrl.u32 %v2266, 7
    %v2268 = vsub.s32 0, %v2267
    %v2269 = vrot.slane %v2264, %v2268
    %v2270 = vlaneseq
    %v2271 = vshrl.u32 %v2270, 7
    %v2272 = vsub.s32 1, %v2271
    %v2273 = vrot.slane %v2264, %v2272
    %v2308 = vunpack.c.l.b16 %v2232
    %v2309 = vunpack.c.h.b16 %v2232
    %v2310 = vunpack.c.l.b16 %v2233
    %v2311 = vunpack.c.h.b16 %v2233
    %v2312 = vunpack.c.l.b16 %v2234
    %v2313 = vunpack.c.h.b16 %v2234
    %v2314 = vunpack.c.l.b16 %v2235
    %v2315 = vunpack.c.h.b16 %v2235
    %v2316 = vunpack.c.l.b16 %v2236
    %v2317 = vunpack.c.h.b16 %v2236
    %v2318 = vunpack.c.l.b16 %v2237
    %v2319 = vunpack.c.h.b16 %v2237
    %v2320 = vunpack.c.l.b16 %v2238
    %v2321 = vunpack.c.h.b16 %v2238
    %v2322 = vunpack.c.l.b16 %v2239
    %v2323 = vunpack.c.h.b16 %v2239
    %v2324 = vunpack.c.l.b16 %v2240
    %v2325 = vunpack.c.h.b16 %v2240
    %v2326 = vunpack.c.l.b16 %v2241
    %v2327 = vunpack.c.h.b16 %v2241
    %v2328 = vunpack.c.l.b16 %v2242
    %v2329 = vunpack.c.h.b16 %v2242
    %v2330 = vunpack.c.l.b16 %v2243
    %v2331 = vunpack.c.h.b16 %v2243
    %v2332 = vunpack.c.l.b16 %v2244
    %v2333 = vunpack.c.h.b16 %v2244
    %v2334 = vunpack.c.l.b16 %v2245
    %v2335 = vunpack.c.h.b16 %v2245
    %v2336 = vunpack.c.l.b16 %v2246
    %v2337 = vunpack.c.h.b16 %v2246
    %v2338 = vunpack.c.l.b16 %v2247
    %v2339 = vunpack.c.h.b16 %v2247
    %v2340 = vunpack.c.l.b16 %v2248
    %v2341 = vunpack.c.h.b16 %v2248
    %v2342 = vunpack.c.l.b16 %v2249
    %v2343 = vunpack.c.h.b16 %v2249
    %v2344 = vunpack.c.l.b16 %v2250
    %v2345 = vunpack.c.h.b16 %v2250
    %v2346 = vunpack.c.l.b16 %v2251
    %v2347 = vunpack.c.h.b16 %v2251
    %v2348 = vunpack.c.l.b16 %v2252
    %v2349 = vunpack.c.h.b16 %v2252
    %v2350 = vunpack.c.l.b16 %v2253
    %v2351 = vunpack.c.h.b16 %v2253
    %v2352 = vunpack.c.l.b16 %v2254
    %v2353 = vunpack.c.h.b16 %v2254
    %v2354 = vunpack.c.l.b16 %v2255
    %v2355 = vunpack.c.h.b16 %v2255
    %v2356 = vunpack.c.l.b16 %v2256
    %v2357 = vunpack.c.h.b16 %v2256
    %v2358 = vunpack.c.l.b16 %v2257
    %v2359 = vunpack.c.h.b16 %v2257
    %v2360 = vunpack.c.l.b16 %v2258
    %v2361 = vunpack.c.h.b16 %v2258
    %v2362 = vunpack.c.l.b16 %v2259
    %v2363 = vunpack.c.h.b16 %v2259
    %v2364 = vunpack.c.l.b16 %v2260
    %v2365 = vunpack.c.h.b16 %v2260
    %v2366 = vunpack.c.l.b16 %v2261
    %v2367 = vunpack.c.h.b16 %v2261
    %v2368 = vunpack.c.l.b16 %v2262
    %v2369 = vunpack.c.h.b16 %v2262
    %v2370 = vunpack.c.l.b16 %v2263
    %v2371 = vunpack.c.h.b16 %v2263
    %v2372 = vpack.c.b16 %v2310, %v2308
    %v2373 = vpack.c.b16 %v2311, %v2309
    %v2374 = vpack.c.b16 %v2314, %v2312
    %v2375 = vpack.c.b16 %v2315, %v2313
    %v2376 = vpack.c.b16 %v2318, %v2316
    %v2377 = vpack.c.b16 %v2319, %v2317
    %v2378 = vpack.c.b16 %v2322, %v2320
    %v2379 = vpack.c.b16 %v2323, %v2321
    %v2380 = vpack.c.b16 %v2326, %v2324
    %v2381 = vpack.c.b16 %v2327, %v2325
    %v2382 = vpack.c.b16 %v2330, %v2328
    %v2383 = vpack.c.b16 %v2331, %v2329
    %v2384 = vpack.c.b16 %v2334, %v2332
    %v2385 = vpack.c.b16 %v2335, %v2333
    %v2386 = vpack.c.b16 %v2338, %v2336
    %v2387 = vpack.c.b16 %v2339, %v2337
    %v2388 = vpack.c.b16 %v2342, %v2340
    %v2389 = vpack.c.b16 %v2343, %v2341
    %v2390 = vpack.c.b16 %v2346, %v2344
    %v2391 = vpack.c.b16 %v2347, %v2345
    %v2392 = vpack.c.b16 %v2350, %v2348
    %v2393 = vpack.c.b16 %v2351, %v2349
    %v2394 = vpack.c.b16 %v2354, %v2352
    %v2395 = vpack.c.b16 %v2355, %v2353
    %v2396 = vpack.c.b16 %v2358, %v2356
    %v2397 = vpack.c.b16 %v2359, %v2357
    %v2398 = vpack.c.b16 %v2362, %v2360
    %v2399 = vpack.c.b16 %v2363, %v2361
    %v2400 = vpack.c.b16 %v2366, %v2364
    %v2401 = vpack.c.b16 %v2367, %v2365
    %v2402 = vpack.c.b16 %v2370, %v2368
    %v2403 = vpack.c.b16 %v2371, %v2369
    %2436 = vmatprep.subr.bf16.mxu0 %v2373
    %2437 = vmatpush1.bf16.msra.mxu0 %v2372
    %2438 = vmatprep.subr.bf16.mxu0 %v2375
    %2439 = vmatpush1.bf16.msra.mxu0 %v2374
    %2440 = vmatprep.subr.bf16.mxu0 %v2377
    %2441 = vmatpush1.bf16.msra.mxu0 %v2376
    %2442 = vmatprep.subr.bf16.mxu0 %v2379
    %2443 = vmatpush1.bf16.msra.mxu0 %v2378
    %2444 = vmatprep.subr.bf16.mxu0 %v2381
    %2445 = vmatpush1.bf16.msra.mxu0 %v2380
    %2446 = vmatprep.subr.bf16.mxu0 %v2383
    %2447 = vmatpush1.bf16.msra.mxu0 %v2382
    %2448 = vmatprep.subr.bf16.mxu0 %v2385
    %2449 = vmatpush1.bf16.msra.mxu0 %v2384
    %2450 = vmatprep.subr.bf16.mxu0 %v2387
    %2451 = vmatpush1.bf16.msra.mxu0 %v2386
    %2452 = vmatprep.subr.bf16.mxu0 %v2389
    %2453 = vmatpush1.bf16.msra.mxu0 %v2388
    %2454 = vmatprep.subr.bf16.mxu0 %v2391
    %2455 = vmatpush1.bf16.msra.mxu0 %v2390
    %2456 = vmatprep.subr.bf16.mxu0 %v2393
    %2457 = vmatpush1.bf16.msra.mxu0 %v2392
    %2458 = vmatprep.subr.bf16.mxu0 %v2395
    %2459 = vmatpush1.bf16.msra.mxu0 %v2394
    %2460 = vmatprep.subr.bf16.mxu0 %v2397
    %2461 = vmatpush1.bf16.msra.mxu0 %v2396
    %2462 = vmatprep.subr.bf16.mxu0 %v2399
    %2463 = vmatpush1.bf16.msra.mxu0 %v2398
    %2464 = vmatprep.subr.bf16.mxu0 %v2401
    %2465 = vmatpush1.bf16.msra.mxu0 %v2400
    %2466 = vmatprep.subr.bf16.mxu0 %v2403
    %2467 = vmatpush1.bf16.msra.mxu0 %v2402
    %2468 = vmatprep.mubr.bf16.mxu0 %v2217
    %2469 = vmatmul.mubr.bf16.gmra.mrb[0].mxu0 %v2216
    %v2470 = vpop.f32.mrb[0].mxu0
    %v2471 = vadd.f32 %v2269, %v2470
    %v2472 = vpop.f32.mrb[0].mxu0
    %v2473 = vadd.f32 %v2273, %v2472
    %v2474 = vpop.f32.mrb[0].mxu0
    %v2475 = vadd.f32 %v2269, %v2474
    %v2476 = vpop.f32.mrb[0].mxu0
    %v2477 = vadd.f32 %v2273, %v2476
    %2478 = vmatprep.mubr.bf16.mxu0 %v2219
    %2479 = vmatmul.mubr.bf16.gmra.mrb[0].mxu0 %v2218
    %v2480 = vpop.f32.mrb[0].mxu0
    %v2481 = vadd.f32 %v2269, %v2480
    %v2482 = vpop.f32.mrb[0].mxu0
    %v2483 = vadd.f32 %v2273, %v2482
    %v2484 = vpop.f32.mrb[0].mxu0
    %v2485 = vadd.f32 %v2269, %v2484
    %v2486 = vpop.f32.mrb[0].mxu0
    %v2487 = vadd.f32 %v2273, %v2486
    %2488 = vmatprep.mubr.bf16.mxu0 %v2221
    %2489 = vmatmul.mubr.bf16.gmra.mrb[0].mxu0 %v2220
    %v2490 = vpop.f32.mrb[0].mxu0
    %v2491 = vadd.f32 %v2269, %v2490
    %v2492 = vpop.f32.mrb[0].mxu0
    %v2493 = vadd.f32 %v2273, %v2492
    %v2494 = vpop.f32.mrb[0].mxu0
    %v2495 = vadd.f32 %v2269, %v2494
    %v2496 = vpop.f32.mrb[0].mxu0
    %v2497 = vadd.f32 %v2273, %v2496
    %2498 = vmatprep.mubr.bf16.mxu0 %v2223
    %2499 = vmatmul.mubr.bf16.gmra.mrb[0].mxu0 %v2222
    %v2500 = vpop.f32.mrb[0].mxu0
    %v2501 = vadd.f32 %v2269, %v2500
    %v2502 = vpop.f32.mrb[0].mxu0
    %v2503 = vadd.f32 %v2273, %v2502
    %v2504 = vpop.f32.mrb[0].mxu0
    %v2505 = vadd.f32 %v2269, %v2504
    %v2506 = vpop.f32.mrb[0].mxu0
    %v2507 = vadd.f32 %v2273, %v2506
    %2508 = vmatprep.mubr.bf16.mxu0 %v2225
    %2509 = vmatmul.mubr.bf16.gmra.mrb[0].mxu0 %v2224
    %v2510 = vpop.f32.mrb[0].mxu0
    %v2511 = vadd.f32 %v2269, %v2510
    %v2512 = vpop.f32.mrb[0].mxu0
    %v2513 = vadd.f32 %v2273, %v2512
    %v2514 = vpop.f32.mrb[0].mxu0
    %v2515 = vadd.f32 %v2269, %v2514
    %v2516 = vpop.f32.mrb[0].mxu0
    %v2517 = vadd.f32 %v2273, %v2516
    %2518 = vmatprep.mubr.bf16.mxu0 %v2227
    %2519 = vmatmul.mubr.bf16.gmra.mrb[0].mxu0 %v2226
    %v2520 = vpop.f32.mrb[0].mxu0
    %v2521 = vadd.f32 %v2269, %v2520
    %v2522 = vpop.f32.mrb[0].mxu0
    %v2523 = vadd.f32 %v2273, %v2522
    %v2524 = vpop.f32.mrb[0].mxu0
    %v2525 = vadd.f32 %v2269, %v2524
    %v2526 = vpop.f32.mrb[0].mxu0
    %v2527 = vadd.f32 %v2273, %v2526
    %2528 = vmatprep.mubr.bf16.mxu0 %v2229
    %2529 = vmatmul.mubr.bf16.gmra.mrb[0].mxu0 %v2228
    %v2530 = vpop.f32.mrb[0].mxu0
    %v2531 = vadd.f32 %v2269, %v2530
    %v2532 = vpop.f32.mrb[0].mxu0
    %v2533 = vadd.f32 %v2273, %v2532
    %v2534 = vpop.f32.mrb[0].mxu0
    %v2535 = vadd.f32 %v2269, %v2534
    %v2536 = vpop.f32.mrb[0].mxu0
    %v2537 = vadd.f32 %v2273, %v2536
    %2538 = vmatprep.mubr.bf16.mxu0 %v2231
    %2539 = vmatmul.mubr.bf16.gmra.mrb[0].mxu0 %v2230
    %v2540 = vpop.f32.mrb[0].mxu0
    %v2541 = vadd.f32 %v2269, %v2540
    %v2542 = vpop.f32.mrb[0].mxu0
    %v2543 = vadd.f32 %v2273, %v2542
    %v2544 = vpop.f32.mrb[0].mxu0
    %v2545 = vadd.f32 %v2269, %v2544
    %v2546 = vpop.f32.mrb[0].mxu0
    %v2547 = vadd.f32 %v2273, %v2546
    %2548 = vdwg.mxu0
    %v2549 = vmax.f32 %v2471, 0.0
    %v2550 = vmax.f32 %v2473, 0.0
    %v2551 = vmax.f32 %v2475, 0.0
    %v2552 = vmax.f32 %v2477, 0.0
    %v2553 = vmax.f32 %v2481, 0.0
    %v2554 = vmax.f32 %v2483, 0.0
    %v2555 = vmax.f32 %v2485, 0.0
    %v2556 = vmax.f32 %v2487, 0.0
    %v2557 = vmax.f32 %v2491, 0.0
    %v2558 = vmax.f32 %v2493, 0.0
    %v2559 = vmax.f32 %v2495, 0.0
    %v2560 = vmax.f32 %v2497, 0.0
    %v2561 = vmax.f32 %v2501, 0.0
    %v2562 = vmax.f32 %v2503, 0.0
    %v2563 = vmax.f32 %v2505, 0.0
    %v2564 = vmax.f32 %v2507, 0.0
    %v2565 = vmax.f32 %v2511, 0.0
    %v2566 = vmax.f32 %v2513, 0.0
    %v2567 = vmax.f32 %v2515, 0.0
    %v2568 = vmax.f32 %v2517, 0.0
    %v2569 = vmax.f32 %v2521, 0.0
    %v2570 = vmax.f32 %v2523, 0.0
    %v2571 = vmax.f32 %v2525, 0.0
    %v2572 = vmax.f32 %v2527, 0.0
    %v2573 = vmax.f32 %v2531, 0.0
    %v2574 = vmax.f32 %v2533, 0.0
    %v2575 = vmax.f32 %v2535, 0.0
    %v2576 = vmax.f32 %v2537, 0.0
    %v2577 = vmax.f32 %v2541, 0.0
    %v2578 = vmax.f32 %v2543, 0.0
    %v2579 = vmax.f32 %v2545, 0.0
    %v2580 = vmax.f32 %v2547, 0.0
    %v2581 = vpack.c.bf16 %v2551, %v2549
    %v2582 = vpack.c.bf16 %v2552, %v2550
    %v2583 = vpack.c.bf16 %v2555, %v2553
    %v2584 = vpack.c.bf16 %v2556, %v2554
    %v2585 = vpack.c.bf16 %v2559, %v2557
    %v2586 = vpack.c.bf16 %v2560, %v2558
    %v2587 = vpack.c.bf16 %v2563, %v2561
    %v2588 = vpack.c.bf16 %v2564, %v2562
    %v2589 = vpack.c.bf16 %v2567, %v2565
    %v2590 = vpack.c.bf16 %v2568, %v2566
    %v2591 = vpack.c.bf16 %v2571, %v2569
    %v2592 = vpack.c.bf16 %v2572, %v2570
    %v2593 = vpack.c.bf16 %v2575, %v2573
    %v2594 = vpack.c.bf16 %v2576, %v2574
    %v2595 = vpack.c.bf16 %v2579, %v2577
    %v2596 = vpack.c.bf16 %v2580, %v2578
    %v2597 = vld [vmem:[#allocation8] sm:$0xf]
    %v2598 = vld [vmem:[#allocation8 + $0x4] sm:$0xf]
    %v2599 = vld [vmem:[#allocation8 + $0x8] sm:$0xf]
    %v2600 = vld [vmem:[#allocation8 + $0xc] sm:$0xf]
    %v2601 = vld [vmem:[#allocation8 + $0x10] sm:$0xf]
    %v2602 = vld [vmem:[#allocation8 + $0x14] sm:$0xf]
    %v2603 = vld [vmem:[#allocation8 + $0x18] sm:$0xf]
    %v2604 = vld [vmem:[#allocation8 + $0x1c] sm:$0xf]
    %v2605 = vld [vmem:[#allocation8 + $0x20] sm:$0xf]
    %v2606 = vld [vmem:[#allocation8 + $0x24] sm:$0xf]
    %v2607 = vld [vmem:[#allocation8 + $0x28] sm:$0xf]
    %v2608 = vld [vmem:[#allocation8 + $0x2c] sm:$0xf]
    %v2609 = vld [vmem:[#allocation8 + $0x30] sm:$0xf]
    %v2610 = vld [vmem:[#allocation8 + $0x34] sm:$0xf]
    %v2611 = vld [vmem:[#allocation8 + $0x38] sm:$0xf]
    %v2612 = vld [vmem:[#allocation8 + $0x3c] sm:$0xf]
    %v2613 = vld [vmem:[#allocation8 + $0x40] sm:$0xf]
    %v2614 = vld [vmem:[#allocation8 + $0x44] sm:$0xf]
    %v2615 = vld [vmem:[#allocation8 + $0x48] sm:$0xf]
    %v2616 = vld [vmem:[#allocation8 + $0x4c] sm:$0xf]
    %v2617 = vld [vmem:[#allocation8 + $0x50] sm:$0xf]
    %v2618 = vld [vmem:[#allocation8 + $0x54] sm:$0xf]
    %v2619 = vld [vmem:[#allocation8 + $0x58] sm:$0xf]
    %v2620 = vld [vmem:[#allocation8 + $0x5c] sm:$0xf]
    %v2621 = vld [vmem:[#allocation8 + $0x60] sm:$0xf]
    %v2622 = vld [vmem:[#allocation8 + $0x64] sm:$0xf]
    %v2623 = vld [vmem:[#allocation8 + $0x68] sm:$0xf]
    %v2624 = vld [vmem:[#allocation8 + $0x6c] sm:$0xf]
    %v2625 = vld [vmem:[#allocation8 + $0x70] sm:$0xf]
    %v2626 = vld [vmem:[#allocation8 + $0x74] sm:$0xf]
    %v2627 = vld [vmem:[#allocation8 + $0x78] sm:$0xf]
    %v2628 = vld [vmem:[#allocation8 + $0x7c] sm:$0xf]
    %v2629 = vld [vmem:[%s8] sm:$0x1]
    %v2631 = vlaneseq
    %v2632 = vshrl.u32 %v2631, 7
    %v2633 = vsub.s32 0, %v2632
    %v2634 = vrot.slane %v2629, %v2633
    %v2668 = vunpack.c.l.b16 %v2597
    %v2669 = vunpack.c.l.b16 %v2598
    %v2670 = vunpack.c.l.b16 %v2599
    %v2671 = vunpack.c.l.b16 %v2600
    %v2672 = vunpack.c.l.b16 %v2601
    %v2673 = vunpack.c.l.b16 %v2602
    %v2674 = vunpack.c.l.b16 %v2603
    %v2675 = vunpack.c.l.b16 %v2604
    %v2676 = vunpack.c.l.b16 %v2605
    %v2677 = vunpack.c.l.b16 %v2606
    %v2678 = vunpack.c.l.b16 %v2607
    %v2679 = vunpack.c.l.b16 %v2608
    %v2680 = vunpack.c.l.b16 %v2609
    %v2681 = vunpack.c.l.b16 %v2610
    %v2682 = vunpack.c.l.b16 %v2611
    %v2683 = vunpack.c.l.b16 %v2612
    %v2684 = vunpack.c.l.b16 %v2613
    %v2685 = vunpack.c.l.b16 %v2614
    %v2686 = vunpack.c.l.b16 %v2615
    %v2687 = vunpack.c.l.b16 %v2616
    %v2688 = vunpack.c.l.b16 %v2617
    %v2689 = vunpack.c.l.b16 %v2618
    %v2690 = vunpack.c.l.b16 %v2619
    %v2691 = vunpack.c.l.b16 %v2620
    %v2692 = vunpack.c.l.b16 %v2621
    %v2693 = vunpack.c.l.b16 %v2622
    %v2694 = vunpack.c.l.b16 %v2623
    %v2695 = vunpack.c.l.b16 %v2624
    %v2696 = vunpack.c.l.b16 %v2625
    %v2697 = vunpack.c.l.b16 %v2626
    %v2698 = vunpack.c.l.b16 %v2627
    %v2699 = vunpack.c.l.b16 %v2628
    %v2700 = vpack.c.b16 %v2669, %v2668
    %v2701 = vpack.c.b16 %v2671, %v2670
    %v2702 = vpack.c.b16 %v2673, %v2672
    %v2703 = vpack.c.b16 %v2675, %v2674
    %v2704 = vpack.c.b16 %v2677, %v2676
    %v2705 = vpack.c.b16 %v2679, %v2678
    %v2706 = vpack.c.b16 %v2681, %v2680
    %v2707 = vpack.c.b16 %v2683, %v2682
    %v2708 = vpack.c.b16 %v2685, %v2684
    %v2709 = vpack.c.b16 %v2687, %v2686
    %v2710 = vpack.c.b16 %v2689, %v2688
    %v2711 = vpack.c.b16 %v2691, %v2690
    %v2712 = vpack.c.b16 %v2693, %v2692
    %v2713 = vpack.c.b16 %v2695, %v2694
    %v2714 = vpack.c.b16 %v2697, %v2696
    %v2715 = vpack.c.b16 %v2699, %v2698
    %2732 = vmatprep.subr.bf16.mxu0 0
    %2733 = vmatpush1.bf16.msra.mxu0 %v2700
    %2734 = vmatprep.subr.bf16.mxu0 0
    %2735 = vmatpush1.bf16.msra.mxu0 %v2701
    %2736 = vmatprep.subr.bf16.mxu0 0
    %2737 = vmatpush1.bf16.msra.mxu0 %v2702
    %2738 = vmatprep.subr.bf16.mxu0 0
    %2739 = vmatpush1.bf16.msra.mxu0 %v2703
    %2740 = vmatprep.subr.bf16.mxu0 0
    %2741 = vmatpush1.bf16.msra.mxu0 %v2704
    %2742 = vmatprep.subr.bf16.mxu0 0
    %2743 = vmatpush1.bf16.msra.mxu0 %v2705
    %2744 = vmatprep.subr.bf16.mxu0 0
    %2745 = vmatpush1.bf16.msra.mxu0 %v2706
    %2746 = vmatprep.subr.bf16.mxu0 0
    %2747 = vmatpush1.bf16.msra.mxu0 %v2707
    %2748 = vmatprep.subr.bf16.mxu0 0
    %2749 = vmatpush1.bf16.msra.mxu0 %v2708
    %2750 = vmatprep.subr.bf16.mxu0 0
    %2751 = vmatpush1.bf16.msra.mxu0 %v2709
    %2752 = vmatprep.subr.bf16.mxu0 0
    %2753 = vmatpush1.bf16.msra.mxu0 %v2710
    %2754 = vmatprep.subr.bf16.mxu0 0
    %2755 = vmatpush1.bf16.msra.mxu0 %v2711
    %2756 = vmatprep.subr.bf16.mxu0 0
    %2757 = vmatpush1.bf16.msra.mxu0 %v2712
    %2758 = vmatprep.subr.bf16.mxu0 0
    %2759 = vmatpush1.bf16.msra.mxu0 %v2713
    %2760 = vmatprep.subr.bf16.mxu0 0
    %2761 = vmatpush1.bf16.msra.mxu0 %v2714
    %2762 = vmatprep.subr.bf16.mxu0 0
    %2763 = vmatpush1.bf16.msra.mxu0 %v2715
    %2764 = vmatprep.mubr.bf16.mxu0 %v2582
    %2765 = vmatmul.mubr.bf16.gmra.mrb[0].mxu0 %v2581
    %v2766 = vpop.f32.mrb[0].mxu0
    %v2767 = vadd.f32 %v2634, %v2766
    %v2768 = vpop.f32.mrb[0].mxu0
    %v2769 = vpop.f32.mrb[0].mxu0
    %v2770 = vadd.f32 %v2634, %v2769
    %v2771 = vpop.f32.mrb[0].mxu0
    %2772 = vmatprep.mubr.bf16.mxu0 %v2584
    %2773 = vmatmul.mubr.bf16.gmra.mrb[0].mxu0 %v2583
    %v2774 = vpop.f32.mrb[0].mxu0
    %v2775 = vadd.f32 %v2634, %v2774
    %v2776 = vpop.f32.mrb[0].mxu0
    %v2777 = vpop.f32.mrb[0].mxu0
    %v2778 = vadd.f32 %v2634, %v2777
    %v2779 = vpop.f32.mrb[0].mxu0
    %2780 = vmatprep.mubr.bf16.mxu0 %v2586
    %2781 = vmatmul.mubr.bf16.gmra.mrb[0].mxu0 %v2585
    %v2782 = vpop.f32.mrb[0].mxu0
    %v2783 = vadd.f32 %v2634, %v2782
    %v2784 = vpop.f32.mrb[0].mxu0
    %v2785 = vpop.f32.mrb[0].mxu0
    %v2786 = vadd.f32 %v2634, %v2785
    %v2787 = vpop.f32.mrb[0].mxu0
    %2788 = vmatprep.mubr.bf16.mxu0 %v2588
    %2789 = vmatmul.mubr.bf16.gmra.mrb[0].mxu0 %v2587
    %v2790 = vpop.f32.mrb[0].mxu0
    %v2791 = vadd.f32 %v2634, %v2790
    %v2792 = vpop.f32.mrb[0].mxu0
    %v2793 = vpop.f32.mrb[0].mxu0
    %v2794 = vadd.f32 %v2634, %v2793
    %v2795 = vpop.f32.mrb[0].mxu0
    %2796 = vmatprep.mubr.bf16.mxu0 %v2590
    %2797 = vmatmul.mubr.bf16.gmra.mrb[0].mxu0 %v2589
    %v2798 = vpop.f32.mrb[0].mxu0
    %v2799 = vadd.f32 %v2634, %v2798
    %v2800 = vpop.f32.mrb[0].mxu0
    %v2801 = vpop.f32.mrb[0].mxu0
    %v2802 = vadd.f32 %v2634, %v2801
    %v2803 = vpop.f32.mrb[0].mxu0
    %2804 = vmatprep.mubr.bf16.mxu0 %v2592
    %2805 = vmatmul.mubr.bf16.gmra.mrb[0].mxu0 %v2591
    %v2806 = vpop.f32.mrb[0].mxu0
    %v2807 = vadd.f32 %v2634, %v2806
    %v2808 = vpop.f32.mrb[0].mxu0
    %v2809 = vpop.f32.mrb[0].mxu0
    %v2810 = vadd.f32 %v2634, %v2809
    %v2811 = vpop.f32.mrb[0].mxu0
    %2812 = vmatprep.mubr.bf16.mxu0 %v2594
    %2813 = vmatmul.mubr.bf16.gmra.mrb[0].mxu0 %v2593
    %v2814 = vpop.f32.mrb[0].mxu0
    %v2815 = vadd.f32 %v2634, %v2814
    %v2816 = vpop.f32.mrb[0].mxu0
    %v2817 = vpop.f32.mrb[0].mxu0
    %v2818 = vadd.f32 %v2634, %v2817
    %v2819 = vpop.f32.mrb[0].mxu0
    %2820 = vmatprep.mubr.bf16.mxu0 %v2596
    %2821 = vmatmul.mubr.bf16.gmra.mrb[0].mxu0 %v2595
    %v2822 = vpop.f32.mrb[0].mxu0
    %v2823 = vadd.f32 %v2634, %v2822
    %v2824 = vpop.f32.mrb[0].mxu0
    %v2825 = vpop.f32.mrb[0].mxu0
    %v2826 = vadd.f32 %v2634, %v2825
    %v2827 = vpop.f32.mrb[0].mxu0
    %2828 = vdwg.mxu0
    %2829 = vst [vmem:[#allocation10] sm:$0xff] %v2767
    %2830 = vst [vmem:[#allocation10 + $0x8] sm:$0xff] %v2770
    %2831 = vst [vmem:[#allocation10 + $0x10] sm:$0xff] %v2775
    %2832 = vst [vmem:[#allocation10 + $0x18] sm:$0xff] %v2778
    %2833 = vst [vmem:[#allocation10 + $0x20] sm:$0xff] %v2783
    %2834 = vst [vmem:[#allocation10 + $0x28] sm:$0xff] %v2786
    %2835 = vst [vmem:[#allocation10 + $0x30] sm:$0xff] %v2791
    %2836 = vst [vmem:[#allocation10 + $0x38] sm:$0xff] %v2794
    %2837 = vst [vmem:[#allocation10 + $0x40] sm:$0xff] %v2799
    %2838 = vst [vmem:[#allocation10 + $0x48] sm:$0xff] %v2802
    %2839 = vst [vmem:[#allocation10 + $0x50] sm:$0xff] %v2807
    %2840 = vst [vmem:[#allocation10 + $0x58] sm:$0xff] %v2810
    %2841 = vst [vmem:[#allocation10 + $0x60] sm:$0xff] %v2815
    %2842 = vst [vmem:[#allocation10 + $0x68] sm:$0xff] %v2818
    %2843 = vst [vmem:[#allocation10 + $0x70] sm:$0xff] %v2823
    %2844 = vst [vmem:[#allocation10 + $0x78] sm:$0xff] %v2826
    // Predicated region
    $region54: #{tpu_custom_call.1} parent=1 // pred_check
      _
    $region55: #{tpu_custom_call.1} parent=1 // pred_check_branch
      %2846 = sbr.rel (0) target = $region57
    $region56: #{tpu_custom_call.1} parent=1 // pred_region
      %s2848 = ssub.s32 2048, 2048
      %2849 = vsyncadd [#allocation4], %s2848
      %s2850 = sshll.u32 [#allocation10], 4
      %s2851 = int_to_ptr.vmem [resolvable:$true] %s2850
      %2856 = dma.vmem_to_hbm [thread:$0]  %s2851, 2048, %s9, [#allocation4], 128, 128, 8
    $region57: #{tpu_custom_call.1} parent=1 // pred_fallthru
      _
    // Predicated region
    $region58: #{tpu_custom_call.1} parent=1 // pred_check
      _
    $region59: #{tpu_custom_call.1} parent=1 // pred_check_branch
      %2858 = sbr.rel (0) target = $region61
    $region60: #{tpu_custom_call.1} parent=1 // pred_region
      %2859 = dma.done [#allocation4], 2048
    $region61: #{tpu_custom_call.1} parent=1 // pred_fallthru
      _
    %2860 = vsyncpa [#allocation3], 1
    %2861 = vsyncpa [#allocation6], 1
    %2862 = vsyncpa [#allocation9], 1
    %2863 = vsyncpa [#allocation4], 1

</llo_original>
